<compile_context>
chip_gen: v7x
topology: tpu7x:2x2x1
jax: 0.10.0
libtpu: 0.0.40
codegen_flags: <defaults>
</compile_context>

<pallas_src>
import jax
import jax.numpy as jnp
from jax import lax
from jax.experimental import pallas as pl
from jax.experimental.pallas import tpu as pltpu


def _round_up(v, m):
    return ((v + m - 1) // m) * m


def _tree_sum(parts):
    """Balanced-tree sum of a list of equal-shape arrays (short VPU dep chain)."""
    while len(parts) > 1:
        nxt = [parts[i] + parts[i + 1] for i in range(0, len(parts) - 1, 2)]
        if len(parts) % 2:
            nxt.append(parts[-1])
        parts = nxt
    return parts[0]


# ----------------------------------------------------------------------------
# Pallas kernel factory (one grid step == one chunk of timesteps)
# ----------------------------------------------------------------------------
def _make_kernel(TC, Bp, B, H, N, NHl, mm_dtype):
    f32 = jnp.float32

    def kernel(x_ref, op_ref,
               we1_ref, be1_ref, we2_ref, be2_ref,          # encoder
               wi_ref, bih_ref, wh_ref,                     # GroupRNNCell i2h/h2h
               wr1_ref, br1_ref, wr2_ref, br2_ref,          # module router
               wd1_ref, bd1_ref, wd2_ref, bd2_ref,          # decoder
               rmat_ref,                                    # (N, NHl) module expand
               out_ref,
               pre_sc, wexp_sc, logw_sc, hs_sc, hcar_sc):

        def dot(a, b):
            return jnp.dot(a, b, preferred_element_type=f32)

        def c(a):                       # cast activations feeding hoisted matmuls
            return a.astype(mm_dtype)

        # ---- hoist all weight / bias reads out of the loops -------------------
        we1 = we1_ref[...]; be1 = be1_ref[...]
        we2 = we2_ref[...]; be2 = be2_ref[...]
        wi = wi_ref[...]; bih = bih_ref[...]
        wh = wh_ref[...]                                   # f32, serial path
        wr1 = wr1_ref[...]; br1 = br1_ref[...]
        wr2 = wr2_ref[...]; br2 = br2_ref[...]
        wd1 = wd1_ref[...]; bd1 = bd1_ref[...]
        wd2 = wd2_ref[...]; bd2 = bd2_ref[...]
        rmat = rmat_ref[...]

        # ---- init hidden carry on the first chunk ------------------------------
        @pl.when(pl.program_id(0) == 0)
        def _():
            hcar_sc[...] = jnp.zeros_like(hcar_sc)

        # ---- hoisted encoder + i2h (recurrence-free slab matmuls) --------------
        e = jnp.maximum(dot(x_ref[...], we1) + be1, 0.0)
        e = dot(c(e), we2) + be2                           # (TC*Bp, E)
        pre_sc[...] = dot(c(e), wi) + bih                  # (TC*Bp, NHl), h-free part

        # ---- hoisted router: Linear -> ReLU -> Linear --------------------------
        r = jnp.maximum(dot(op_ref[...], wr1) + br1, 0.0)
        logits = dot(c(r), wr2) + br2                      # (TC*Bp, N)
        if B < Bp:
            # mask padded batch rows ONCE on the whole slab (hoisted broadcast)
            rowi = lax.broadcasted_iota(jnp.int32, logits.shape, 0)
            logits = jnp.where((rowi % Bp) < B, logits, -1e30)
        logw_sc[...] = logits

        # batch-axis softmax per timestep (rolled loop, off the serial path)
        @pl.loop(0, TC)
        def _(t):
            i0 = pl.multiple_of(t * Bp, 8)
            lt = logw_sc[pl.ds(i0, Bp), :]                 # (Bp, N)
            m = jnp.max(lt, axis=0, keepdims=True)         # softmax over the BATCH
            ex = jnp.exp(lt - m)
            inv = pl.reciprocal(jnp.sum(ex, axis=0, keepdims=True), approx=True)
            logw_sc[pl.ds(i0, Bp), :] = ex * inv           # overwrite with weights

        # ONE slab matmul expands (TCB, N) weights across module lanes
        wexp_sc[...] = dot(c(logw_sc[...]), rmat)          # (TC*Bp, NHl)

        # ---- serial recurrence: single MXU matmul per step ---------------------
        def step(t, h):
            i0 = pl.multiple_of(t * Bp, 8)
            z = pre_sc[pl.ds(i0, Bp), :] + dot(h, wh)      # (Bp, NHl)
            p = jnp.tanh(z) * wexp_sc[pl.ds(i0, Bp), :]
            # module mixing = static lane-slice tree-sum (no matmul on serial path)
            h_new = _tree_sum([p[:, n * H:(n + 1) * H] for n in range(N)])
            hs_sc[pl.ds(i0, Bp), :] = h_new
            return h_new

        hcar_sc[...] = lax.fori_loop(0, TC, step, hcar_sc[...],
                                     unroll=min(8, TC))    # partial unroll

        # ---- hoisted decoder: slab matmuls + lane-dense output store -----------
        d = jnp.maximum(dot(c(hs_sc[...]), wd1) + bd1, 0.0)
        out_ref[...] = dot(c(d), wd2) + bd2

    return kernel


# ----------------------------------------------------------------------------
# Wrapper: padding, weight prep, chunk/VMEM budgeting, pallas_call
# ----------------------------------------------------------------------------
def modular_rnn_forward(x, op, params, *, chunk_t=None, mm_dtype=jnp.float32,
                        vmem_budget_bytes=40 * 1024 * 1024):
    """x: (B, T, in_size), op: (B, T, num_ops) -> (B, T, out_size)."""
    f32 = jnp.float32
    B, T, in_size = x.shape
    num_ops = op.shape[-1]
    E = params["we1"].shape[0]
    H = params["wh2h"].shape[1]
    N = params["wi2h"].shape[0] // H
    out_size = params["wd2"].shape[0]

    # padded sizes: batch -> sublanes (8); modules packed along lanes (N*H -> 128k)
    Bp = _round_up(B, 8)
    NH = N * H
    NHl = _round_up(NH, 128)
    out_p = _round_up(out_size, 128)           # lane-dense HBM output store
    mm_bytes = jnp.dtype(mm_dtype).itemsize

    # per-timestep VMEM footprint: f32 scratches + double-buffered in/out chunks
    per_t = Bp * ((2 * NHl + H + N) * 4
                  + 2 * (in_size + num_ops) * mm_bytes
                  + 2 * out_p * 4)
    if chunk_t is None:
        chunk_t = int(max(1, min(T, vmem_budget_bytes // max(per_t, 1), 256)))
    T_pad = _round_up(T, chunk_t)
    n_chunks = T_pad // chunk_t
    TCB = chunk_t * Bp

    # --- weight prep: transpose to (in, out); pack modules; pad only N*H/out ----
    def tr(w):
        return jnp.asarray(w, f32).T

    def pad2(a, r, cols):
        return jnp.zeros((r, cols), f32).at[:a.shape[0], :a.shape[1]].set(a)

    def row(b):
        return jnp.asarray(b, f32).reshape(1, -1)

    we1 = tr(params["we1"]); be1 = row(params["be1"])          # (in, E)
    we2 = tr(params["we2"]); be2 = row(params["be2"])          # (E, E)
    wi = pad2(tr(params["wi2h"]), E, NHl)                      # (E, NHl)
    bih = pad2(row(params["bi2h"]) + row(params["bh2h"]), 1, NHl)
    wh = pad2(tr(params["wh2h"]), H, NHl)                      # (H, NHl), f32
    wr1 = tr(params["wr1"]); br1 = row(params["br1"])          # (num_ops, H)
    wr2 = tr(params["wr2"]); br2 = row(params["br2"])          # (H, N)
    wd1 = tr(params["wd1"]); bd1 = row(params["bd1"])          # (H, H)
    wd2 = pad2(tr(params["wd2"]), H, out_p)                    # (H, out_p)
    bd2 = pad2(row(params["bd2"]), 1, out_p)
    # module-expand constant: rmat[n, n*H + j] = 1
    rmat = pad2(jnp.kron(jnp.eye(N, dtype=f32), jnp.ones((1, H), f32)), N, NHl)

    mm = lambda a: a.astype(mm_dtype)          # bf16 knob for hoisted matmuls
    weights = (mm(we1), be1, mm(we2), be2, mm(wi), bih, wh,
               mm(wr1), br1, mm(wr2), br2, mm(wd1), bd1, mm(wd2), bd2, mm(rmat))

    # --- inputs: time-major, pad batch only, keep true last dims (no 128 pad) ---
    def prep(a):
        a = jnp.transpose(jnp.asarray(a, f32), (1, 0, 2))      # (T, B, F)
        F = a.shape[2]
        out = jnp.zeros((T_pad, Bp, F), f32).at[:T, :B, :].set(a)
        return out.reshape(T_pad * Bp, F).astype(mm_dtype)

    xf, opf = prep(x), prep(op)

    def chunk_spec(f):
        return pl.BlockSpec((TCB, f), lambda c: (c, 0))

    def full_spec(a):
        return pl.BlockSpec(a.shape, lambda c: (0,) * a.ndim)

    in_specs = ([chunk_spec(in_size), chunk_spec(num_ops)]
                + [full_spec(w) for w in weights])

    # explicit VMEM limit (v5e default scoped limit is only 16 MiB; v7x cap 64)
    w_bytes = sum(int(w.size) * w.dtype.itemsize for w in weights)
    need = chunk_t * per_t + 2 * w_bytes + Bp * H * 4
    vmem_limit = int(min(max(need + (8 << 20), 32 << 20), 48 << 20))

    kernel = _make_kernel(chunk_t, Bp, B, H, N, NHl, mm_dtype)
    out_flat = pl.pallas_call(
        kernel,
        out_shape=jax.ShapeDtypeStruct((T_pad * Bp, out_p), f32),
        grid=(n_chunks,),
        in_specs=in_specs,
        out_specs=pl.BlockSpec((TCB, out_p), lambda c: (c, 0)),
        scratch_shapes=[
            pltpu.VMEM((TCB, NHl), f32),   # i2h pre-activation (biases folded)
            pltpu.VMEM((TCB, NHl), f32),   # expanded router weights
            pltpu.VMEM((TCB, N), f32),     # logits -> softmax weights (in place)
            pltpu.VMEM((TCB, H), f32),     # per-step hidden states (decoder input)
            pltpu.VMEM((Bp, H), f32),      # hidden carry across chunks
        ],
        compiler_params=pltpu.CompilerParams(
            dimension_semantics=("arbitrary",),   # recurrence -> sequential grid
            vmem_limit_bytes=vmem_limit),
    )(xf, opf, *weights)

    out = out_flat.reshape(T_pad, Bp, out_p)[:T, :B, :out_size]
    return jnp.transpose(out, (1, 0, 2))                       # (B, T, out)


# ----------------------------------------------------------------------------
# Pure-JAX reference (mirrors the PyTorch forward exactly)
# ----------------------------------------------------------------------------
def modular_rnn_reference(x, op, params, hidden_size, n_modules):
    def lin(v, w, b):
        return v @ w.T + b

    B, T, _ = x.shape
    e = jax.nn.relu(lin(x, params["we1"], params["be1"]))
    e = lin(e, params["we2"], params["be2"])                   # (B, T, E)

    h = jnp.zeros((B, hidden_size), jnp.float32)
    hs = []
    for i in range(T):
        x_t, op_t = e[:, i, :], op[:, i, :]
        pre = jnp.tanh(lin(x_t, params["wi2h"], params["bi2h"])
                       + lin(h, params["wh2h"], params["bh2h"]))
        pre = pre.reshape(B, n_modules, hidden_size)
        r = jax.nn.relu(lin(op_t, params["wr1"], params["br1"]))
        logits = lin(r, params["wr2"], params["br2"])
        w = jax.nn.softmax(logits, axis=0)                     # softmax over batch
        h = jnp.einsum("bnh,bn->bh", pre, w)
        hs.append(h)
    hs = jnp.stack(hs, axis=1)                                 # (B, T, H)

    d = jax.nn.relu(lin(hs, params["wd1"], params["bd1"]))
    return lin(d, params["wd2"], params["bd2"])


# ----------------------------------------------------------------------------
# Deterministic parameter init (PyTorch nn.Linear-style uniform bounds)
# ----------------------------------------------------------------------------
def init_params(key, in_size, out_size, enc_out_size, hidden_size, n_modules, num_ops):
    def linear(k, out_f, in_f):
        kw, kb = jax.random.split(k)
        bound = 1.0 / (in_f ** 0.5)
        w = jax.random.uniform(kw, (out_f, in_f), jnp.float32, -bound, bound)
        b = jax.random.uniform(kb, (out_f,), jnp.float32, -bound, bound)
        return w, b

    keys = jax.random.split(key, 8)
    E, H, N = enc_out_size, hidden_size, n_modules
    p = {}
    p["we1"], p["be1"] = linear(keys[0], E, in_size)         # mod_dich: enc_in = in_size
    p["we2"], p["be2"] = linear(keys[1], E, E)
    p["wi2h"], p["bi2h"] = linear(keys[2], H * N, E)
    p["wh2h"], p["bh2h"] = linear(keys[3], H * N, H)
    p["wr1"], p["br1"] = linear(keys[4], H, num_ops)         # router_in_size = num_ops
    p["wr2"], p["br2"] = linear(keys[5], N, H)
    p["wd1"], p["bd1"] = linear(keys[6], H, H)
    p["wd2"], p["bd2"] = linear(keys[7], out_size, H)
    return p


if __name__ == "__main__":
    # Small shapes consistent with ModularRNN.from_args (regression, mod_dich).
    B, T = 2, 8
    in_size = 4
    out_size = in_size          # regression -> out_size == x_dim
    enc_out_size = 16
    hidden_size = 32
    n_modules = num_ops = 4     # n_modules == num_ops == args.n_op

    key = jax.random.PRNGKey(0)
    k_params, k_x, k_op = jax.random.split(key, 3)
    params = init_params(k_params, in_size, out_size, enc_out_size,
                         hidden_size, n_modules, num_ops)

    x = jax.random.normal(k_x, (B, T, in_size), jnp.float32)
    op = jax.random.normal(k_op, (B, T, num_ops), jnp.float32)

    # chunk_t=4 -> 2 grid chunks, exercising the cross-chunk hidden-state carry.
    out = modular_rnn_forward(x, op, params, chunk_t=4)
    out = jax.block_until_ready(out)

    ref = modular_rnn_reference(x, op, params, hidden_size, n_modules)
    assert out.shape == (B, T, out_size)
    # 2e-3 tolerance accommodates the approx (EUP) softmax reciprocal and the
    # TPU default matmul precision; structure/semantics match the reference.
    assert jnp.allclose(out, ref, rtol=2e-3, atol=2e-3), (
        f"max abs err {jnp.max(jnp.abs(out - ref))}")

    print("KERNEL_OK")
</pallas_src>

<mosaic_0001>
module attributes {stable_mosaic.version = 11 : i64} {
  func.func @kernel(%arg0: i32, %arg1: memref<32x4xf32, #tpu.memory_space<vmem>>, %arg2: memref<32x4xf32, #tpu.memory_space<vmem>>, %arg3: memref<4x16xf32, #tpu.memory_space<vmem>>, %arg4: memref<1x16xf32, #tpu.memory_space<vmem>>, %arg5: memref<16x16xf32, #tpu.memory_space<vmem>>, %arg6: memref<1x16xf32, #tpu.memory_space<vmem>>, %arg7: memref<16x128xf32, #tpu.memory_space<vmem>>, %arg8: memref<1x128xf32, #tpu.memory_space<vmem>>, %arg9: memref<32x128xf32, #tpu.memory_space<vmem>>, %arg10: memref<4x32xf32, #tpu.memory_space<vmem>>, %arg11: memref<1x32xf32, #tpu.memory_space<vmem>>, %arg12: memref<32x4xf32, #tpu.memory_space<vmem>>, %arg13: memref<1x4xf32, #tpu.memory_space<vmem>>, %arg14: memref<32x32xf32, #tpu.memory_space<vmem>>, %arg15: memref<1x32xf32, #tpu.memory_space<vmem>>, %arg16: memref<32x128xf32, #tpu.memory_space<vmem>>, %arg17: memref<1x128xf32, #tpu.memory_space<vmem>>, %arg18: memref<4x128xf32, #tpu.memory_space<vmem>>, %arg19: memref<32x128xf32, #tpu.memory_space<vmem>>, %arg20: memref<32x128xf32, #tpu.memory_space<vmem>>, %arg21: memref<32x128xf32, #tpu.memory_space<vmem>>, %arg22: memref<32x4xf32, #tpu.memory_space<vmem>>, %arg23: memref<32x32xf32, #tpu.memory_space<vmem>>, %arg24: memref<8x32xf32, #tpu.memory_space<vmem>>) attributes {dimension_semantics = [#tpu.dimension_semantics<arbitrary>], iteration_bounds = array<i64: 2>, scalar_prefetch = 0 : i64, scratch_operands = 5 : i64, tpu.core_type = #tpu.core_type<tc>, window_params = [{transform_indices = @transform_0, window_bounds = array<i64: 32, 4>}, {transform_indices = @transform_1, window_bounds = array<i64: 32, 4>}, {pipeline_mode = #tpu.pipeline_mode<synchronous>, transform_indices = @transform_2, window_bounds = array<i64: 4, 16>}, {pipeline_mode = #tpu.pipeline_mode<synchronous>, transform_indices = @transform_3, window_bounds = array<i64: 1, 16>}, {pipeline_mode = #tpu.pipeline_mode<synchronous>, transform_indices = @transform_4, window_bounds = array<i64: 16, 16>}, {pipeline_mode = #tpu.pipeline_mode<synchronous>, transform_indices = @transform_5, window_bounds = array<i64: 1, 16>}, {pipeline_mode = #tpu.pipeline_mode<synchronous>, transform_indices = @transform_6, window_bounds = array<i64: 16, 128>}, {pipeline_mode = #tpu.pipeline_mode<synchronous>, transform_indices = @transform_7, window_bounds = array<i64: 1, 128>}, {pipeline_mode = #tpu.pipeline_mode<synchronous>, transform_indices = @transform_8, window_bounds = array<i64: 32, 128>}, {pipeline_mode = #tpu.pipeline_mode<synchronous>, transform_indices = @transform_9, window_bounds = array<i64: 4, 32>}, {pipeline_mode = #tpu.pipeline_mode<synchronous>, transform_indices = @transform_10, window_bounds = array<i64: 1, 32>}, {pipeline_mode = #tpu.pipeline_mode<synchronous>, transform_indices = @transform_11, window_bounds = array<i64: 32, 4>}, {pipeline_mode = #tpu.pipeline_mode<synchronous>, transform_indices = @transform_12, window_bounds = array<i64: 1, 4>}, {pipeline_mode = #tpu.pipeline_mode<synchronous>, transform_indices = @transform_13, window_bounds = array<i64: 32, 32>}, {pipeline_mode = #tpu.pipeline_mode<synchronous>, transform_indices = @transform_14, window_bounds = array<i64: 1, 32>}, {pipeline_mode = #tpu.pipeline_mode<synchronous>, transform_indices = @transform_15, window_bounds = array<i64: 32, 128>}, {pipeline_mode = #tpu.pipeline_mode<synchronous>, transform_indices = @transform_16, window_bounds = array<i64: 1, 128>}, {pipeline_mode = #tpu.pipeline_mode<synchronous>, transform_indices = @transform_17, window_bounds = array<i64: 4, 128>}, {transform_indices = @transform_18, window_bounds = array<i64: 32, 128>}]} {
    %c0 = arith.constant 0 : index
    %c0_0 = arith.constant 0 : index
    %0 = vector.load %arg3[%c0, %c0_0] : memref<4x16xf32, #tpu.memory_space<vmem>>, vector<4x16xf32>
    %c0_1 = arith.constant 0 : index
    %c0_2 = arith.constant 0 : index
    %1 = vector.load %arg4[%c0_1, %c0_2] : memref<1x16xf32, #tpu.memory_space<vmem>>, vector<1x16xf32>
    %c0_3 = arith.constant 0 : index
    %c0_4 = arith.constant 0 : index
    %2 = vector.load %arg5[%c0_3, %c0_4] : memref<16x16xf32, #tpu.memory_space<vmem>>, vector<16x16xf32>
    %c0_5 = arith.constant 0 : index
    %c0_6 = arith.constant 0 : index
    %3 = vector.load %arg6[%c0_5, %c0_6] : memref<1x16xf32, #tpu.memory_space<vmem>>, vector<1x16xf32>
    %c0_7 = arith.constant 0 : index
    %c0_8 = arith.constant 0 : index
    %4 = vector.load %arg7[%c0_7, %c0_8] : memref<16x128xf32, #tpu.memory_space<vmem>>, vector<16x128xf32>
    %c0_9 = arith.constant 0 : index
    %c0_10 = arith.constant 0 : index
    %5 = vector.load %arg8[%c0_9, %c0_10] : memref<1x128xf32, #tpu.memory_space<vmem>>, vector<1x128xf32>
    %c0_11 = arith.constant 0 : index
    %c0_12 = arith.constant 0 : index
    %6 = vector.load %arg9[%c0_11, %c0_12] : memref<32x128xf32, #tpu.memory_space<vmem>>, vector<32x128xf32>
    %c0_13 = arith.constant 0 : index
    %c0_14 = arith.constant 0 : index
    %7 = vector.load %arg10[%c0_13, %c0_14] : memref<4x32xf32, #tpu.memory_space<vmem>>, vector<4x32xf32>
    %c0_15 = arith.constant 0 : index
    %c0_16 = arith.constant 0 : index
    %8 = vector.load %arg11[%c0_15, %c0_16] : memref<1x32xf32, #tpu.memory_space<vmem>>, vector<1x32xf32>
    %c0_17 = arith.constant 0 : index
    %c0_18 = arith.constant 0 : index
    %9 = vector.load %arg12[%c0_17, %c0_18] : memref<32x4xf32, #tpu.memory_space<vmem>>, vector<32x4xf32>
    %c0_19 = arith.constant 0 : index
    %c0_20 = arith.constant 0 : index
    %10 = vector.load %arg13[%c0_19, %c0_20] : memref<1x4xf32, #tpu.memory_space<vmem>>, vector<1x4xf32>
    %c0_21 = arith.constant 0 : index
    %c0_22 = arith.constant 0 : index
    %11 = vector.load %arg14[%c0_21, %c0_22] : memref<32x32xf32, #tpu.memory_space<vmem>>, vector<32x32xf32>
    %c0_23 = arith.constant 0 : index
    %c0_24 = arith.constant 0 : index
    %12 = vector.load %arg15[%c0_23, %c0_24] : memref<1x32xf32, #tpu.memory_space<vmem>>, vector<1x32xf32>
    %c0_25 = arith.constant 0 : index
    %c0_26 = arith.constant 0 : index
    %13 = vector.load %arg16[%c0_25, %c0_26] : memref<32x128xf32, #tpu.memory_space<vmem>>, vector<32x128xf32>
    %c0_27 = arith.constant 0 : index
    %c0_28 = arith.constant 0 : index
    %14 = vector.load %arg17[%c0_27, %c0_28] : memref<1x128xf32, #tpu.memory_space<vmem>>, vector<1x128xf32>
    %c0_29 = arith.constant 0 : index
    %c0_30 = arith.constant 0 : index
    %15 = vector.load %arg18[%c0_29, %c0_30] : memref<4x128xf32, #tpu.memory_space<vmem>>, vector<4x128xf32>
    %c0_i32 = arith.constant 0 : i32
    %16 = arith.cmpi eq, %arg0, %c0_i32 : i32
    %17 = arith.extui %16 : i1 to i32
    %c0_i32_31 = arith.constant 0 : i32
    %18 = arith.cmpi ne, %17, %c0_i32_31 : i32
    scf.if %18 {
      %cst_94 = arith.constant 0.000000e+00 : f32
      %155 = vector.broadcast %cst_94 : f32 to vector<8x32xf32>
      %c0_95 = arith.constant 0 : index
      %c0_96 = arith.constant 0 : index
      %156 = vector.load %arg24[%c0_95, %c0_96] : memref<8x32xf32, #tpu.memory_space<vmem>>, vector<8x32xf32>
      tpu.vector_store %arg24[%c0_95, %c0_96], %155 {strides = array<i32>} : memref<8x32xf32, #tpu.memory_space<vmem>>, vector<8x32xf32>,
    } else {
    }
    %c0_32 = arith.constant 0 : index
    %c0_33 = arith.constant 0 : index
    %19 = vector.load %arg1[%c0_32, %c0_33] : memref<32x4xf32, #tpu.memory_space<vmem>>, vector<32x4xf32>
    %cst = arith.constant dense<0.000000e+00> : vector<32x16xf32>
    %20 = tpu.matmul %19, %0, %cst {dimension_numbers = #tpu.dot_dimension_numbers<[1], [0], [0], [1], [0, 0, 1, 1], [], []>} : vector<32x4xf32>, vector<4x16xf32>, vector<32x16xf32> -> vector<32x16xf32>
    %21 = vector.broadcast %1 : vector<1x16xf32> to vector<32x16xf32>
    %22 = arith.addf %20, %21 : vector<32x16xf32>
    %cst_34 = arith.constant 0.000000e+00 : f32
    %23 = vector.broadcast %cst_34 : f32 to vector<32x16xf32>
    %24 = arith.maximumf %22, %23 : vector<32x16xf32>
    %cst_35 = arith.constant dense<0.000000e+00> : vector<32x16xf32>
    %25 = tpu.matmul %24, %2, %cst_35 {dimension_numbers = #tpu.dot_dimension_numbers<[1], [0], [0], [1], [0, 0, 1, 1], [], []>} : vector<32x16xf32>, vector<16x16xf32>, vector<32x16xf32> -> vector<32x16xf32>
    %26 = vector.broadcast %3 : vector<1x16xf32> to vector<32x16xf32>
    %27 = arith.addf %25, %26 : vector<32x16xf32>
    %cst_36 = arith.constant dense<0.000000e+00> : vector<32x128xf32>
    %28 = tpu.matmul %27, %4, %cst_36 {dimension_numbers = #tpu.dot_dimension_numbers<[1], [0], [0], [1], [0, 0, 1, 1], [], []>} : vector<32x16xf32>, vector<16x128xf32>, vector<32x128xf32> -> vector<32x128xf32>
    %29 = vector.broadcast %5 : vector<1x128xf32> to vector<32x128xf32>
    %30 = arith.addf %28, %29 : vector<32x128xf32>
    %c0_37 = arith.constant 0 : index
    %c0_38 = arith.constant 0 : index
    %31 = vector.load %arg20[%c0_37, %c0_38] : memref<32x128xf32, #tpu.memory_space<vmem>>, vector<32x128xf32>
    tpu.vector_store %arg20[%c0_37, %c0_38], %30 {strides = array<i32>} : memref<32x128xf32, #tpu.memory_space<vmem>>, vector<32x128xf32>,
    %c0_39 = arith.constant 0 : index
    %c0_40 = arith.constant 0 : index
    %32 = vector.load %arg2[%c0_39, %c0_40] : memref<32x4xf32, #tpu.memory_space<vmem>>, vector<32x4xf32>
    %cst_41 = arith.constant dense<0.000000e+00> : vector<32x32xf32>
    %33 = tpu.matmul %32, %7, %cst_41 {dimension_numbers = #tpu.dot_dimension_numbers<[1], [0], [0], [1], [0, 0, 1, 1], [], []>} : vector<32x4xf32>, vector<4x32xf32>, vector<32x32xf32> -> vector<32x32xf32>
    %34 = vector.broadcast %8 : vector<1x32xf32> to vector<32x32xf32>
    %35 = arith.addf %33, %34 : vector<32x32xf32>
    %cst_42 = arith.constant 0.000000e+00 : f32
    %36 = vector.broadcast %cst_42 : f32 to vector<32x32xf32>
    %37 = arith.maximumf %35, %36 : vector<32x32xf32>
    %cst_43 = arith.constant dense<0.000000e+00> : vector<32x4xf32>
    %38 = tpu.matmul %37, %9, %cst_43 {dimension_numbers = #tpu.dot_dimension_numbers<[1], [0], [0], [1], [0, 0, 1, 1], [], []>} : vector<32x32xf32>, vector<32x4xf32>, vector<32x4xf32> -> vector<32x4xf32>
    %39 = vector.broadcast %10 : vector<1x4xf32> to vector<32x4xf32>
    %40 = arith.addf %38, %39 : vector<32x4xf32>
    %41 = tpu.iota {dimensions = array<i32: 0>} : vector<32x4xi32>
    %c8_i32 = arith.constant 8 : i32
    %c0_i32_44 = arith.constant 0 : i32
    %42 = arith.cmpi eq, %c8_i32, %c0_i32_44 : i32
    %c1_i32 = arith.constant 1 : i32
    %43 = arith.select %42, %c1_i32, %c8_i32 : i32
    %44 = vector.broadcast %43 : i32 to vector<32x4xi32>
    %45 = arith.remsi %41, %44 : vector<32x4xi32>
    %c0_i32_45 = arith.constant 0 : i32
    %46 = vector.broadcast %c0_i32_45 : i32 to vector<32x4xi32>
    %47 = arith.cmpi ne, %45, %46 : vector<32x4xi32>
    %c0_i32_46 = arith.constant 0 : i32
    %48 = vector.broadcast %c0_i32_46 : i32 to vector<32x4xi32>
    %49 = arith.cmpi slt, %45, %48 : vector<32x4xi32>
    %c0_i32_47 = arith.constant 0 : i32
    %50 = arith.cmpi slt, %43, %c0_i32_47 : i32
    %51 = vector.broadcast %50 : i1 to vector<32x4xi1>
    %52 = vector.broadcast %51 : vector<32x4xi1> to vector<32x4xi1>
    %53 = arith.xori %49, %52 : vector<32x4xi1>
    %54 = arith.andi %53, %47 : vector<32x4xi1>
    %55 = vector.broadcast %43 : i32 to vector<32x4xi32>
    %56 = arith.addi %45, %55 : vector<32x4xi32>
    %57 = arith.select %54, %56, %45 : vector<32x4xi1>, vector<32x4xi32>
    %c2_i32 = arith.constant 2 : i32
    %58 = vector.broadcast %c2_i32 : i32 to vector<32x4xi32>
    %59 = arith.cmpi slt, %57, %58 : vector<32x4xi32>
    %cst_48 = arith.constant -1.000000e+30 : f32
    %60 = vector.broadcast %cst_48 : f32 to vector<32x4xf32>
    %61 = arith.select %59, %40, %60 : vector<32x4xi1>, vector<32x4xf32>
    %c0_49 = arith.constant 0 : index
    %c0_50 = arith.constant 0 : index
    %62 = vector.load %arg22[%c0_49, %c0_50] : memref<32x4xf32, #tpu.memory_space<vmem>>, vector<32x4xf32>
    tpu.vector_store %arg22[%c0_49, %c0_50], %61 {strides = array<i32>} : memref<32x4xf32, #tpu.memory_space<vmem>>, vector<32x4xf32>,
    %c0_i32_51 = arith.constant 0 : i32
    %c4_i32 = arith.constant 4 : i32
    %63 = arith.addi %c0_i32_51, %c4_i32 : i32
    %c1_i32_52 = arith.constant 1 : i32
    scf.for %arg25 = %c0_i32_51 to %63 step %c1_i32_52  : i32 {
      %c1_i32_94 = arith.constant 1 : i32
      %155 = arith.muli %arg25, %c1_i32_94 : i32
      %c0_i32_95 = arith.constant 0 : i32
      %156 = arith.addi %c0_i32_95, %155 : i32
      %c8_i32_96 = arith.constant 8 : i32
      %157 = arith.muli %156, %c8_i32_96 : i32
      %158 = tpu.assume_multiple %157, 8 : i32
      %159 = arith.index_cast %158 : i32 to index
      %c0_97 = arith.constant 0 : index
      %160 = vector.load %arg22[%159, %c0_97] : memref<32x4xf32, #tpu.memory_space<vmem>>, vector<8x4xf32>
      %cst_98 = arith.constant dense<0xFF800000> : vector<4xf32>
      %161 = vector.multi_reduction <maximumf>, %160, %cst_98 [0] : vector<8x4xf32> to vector<4xf32>
      %162 = vector.shape_cast %161 : vector<4xf32> to vector<1x4xf32>
      %163 = vector.broadcast %162 : vector<1x4xf32> to vector<8x4xf32>
      %164 = arith.subf %160, %163 : vector<8x4xf32>
      %165 = math.exp %164 : vector<8x4xf32>
      %cst_99 = arith.constant dense<0.000000e+00> : vector<4xf32>
      %166 = vector.multi_reduction <add>, %165, %cst_99 [0] : vector<8x4xf32> to vector<4xf32>
      %167 = vector.shape_cast %166 : vector<4xf32> to vector<1x4xf32>
      %168 = tpu.reciprocal %167 {approx = true} : vector<1x4xf32> -> vector<1x4xf32>
      %169 = vector.broadcast %168 : vector<1x4xf32> to vector<8x4xf32>
      %170 = arith.mulf %165, %169 : vector<8x4xf32>
      %171 = arith.index_cast %158 : i32 to index
      %c0_100 = arith.constant 0 : index
      %172 = vector.load %arg22[%171, %c0_100] : memref<32x4xf32, #tpu.memory_space<vmem>>, vector<8x4xf32>
      tpu.vector_store %arg22[%171, %c0_100], %170 {strides = array<i32>} : memref<32x4xf32, #tpu.memory_space<vmem>>, vector<8x4xf32>,
    }
    %c4_i32_53 = arith.constant 4 : i32
    %c0_54 = arith.constant 0 : index
    %c0_55 = arith.constant 0 : index
    %64 = vector.load %arg22[%c0_54, %c0_55] : memref<32x4xf32, #tpu.memory_space<vmem>>, vector<32x4xf32>
    %cst_56 = arith.constant dense<0.000000e+00> : vector<32x128xf32>
    %65 = tpu.matmul %64, %15, %cst_56 {dimension_numbers = #tpu.dot_dimension_numbers<[1], [0], [0], [1], [0, 0, 1, 1], [], []>} : vector<32x4xf32>, vector<4x128xf32>, vector<32x128xf32> -> vector<32x128xf32>
    %c0_57 = arith.constant 0 : index
    %c0_58 = arith.constant 0 : index
    %66 = vector.load %arg21[%c0_57, %c0_58] : memref<32x128xf32, #tpu.memory_space<vmem>>, vector<32x128xf32>
    tpu.vector_store %arg21[%c0_57, %c0_58], %65 {strides = array<i32>} : memref<32x128xf32, #tpu.memory_space<vmem>>, vector<32x128xf32>,
    %c0_59 = arith.constant 0 : index
    %c0_60 = arith.constant 0 : index
    %67 = vector.load %arg24[%c0_59, %c0_60] : memref<8x32xf32, #tpu.memory_space<vmem>>, vector<8x32xf32>
    %c0_i32_61 = arith.constant 0 : i32
    %c8_i32_62 = arith.constant 8 : i32
    %68 = arith.muli %c0_i32_61, %c8_i32_62 : i32
    %69 = tpu.assume_multiple %68, 8 : i32
    %70 = arith.index_cast %69 : i32 to index
    %c0_63 = arith.constant 0 : index
    %71 = vector.load %arg20[%70, %c0_63] : memref<32x128xf32, #tpu.memory_space<vmem>>, vector<8x128xf32>
    %cst_64 = arith.constant dense<0.000000e+00> : vector<8x128xf32>
    %72 = tpu.matmul %67, %6, %cst_64 {dimension_numbers = #tpu.dot_dimension_numbers<[1], [0], [0], [1], [0, 0, 1, 1], [], []>} : vector<8x32xf32>, vector<32x128xf32>, vector<8x128xf32> -> vector<8x128xf32>
    %73 = arith.addf %71, %72 : vector<8x128xf32>
    %74 = math.tanh %73 : vector<8x128xf32>
    %75 = arith.index_cast %69 : i32 to index
    %c0_65 = arith.constant 0 : index
    %76 = vector.load %arg21[%75, %c0_65] : memref<32x128xf32, #tpu.memory_space<vmem>>, vector<8x128xf32>
    %77 = arith.mulf %74, %76 : vector<8x128xf32>
    %78 = vector.extract_strided_slice %77 {offsets = [0, 0], sizes = [8, 32], strides = [1, 1]} : vector<8x128xf32> to vector<8x32xf32>
    %79 = vector.extract_strided_slice %77 {offsets = [0, 32], sizes = [8, 32], strides = [1, 1]} : vector<8x128xf32> to vector<8x32xf32>
    %80 = vector.extract_strided_slice %77 {offsets = [0, 64], sizes = [8, 32], strides = [1, 1]} : vector<8x128xf32> to vector<8x32xf32>
    %81 = vector.extract_strided_slice %77 {offsets = [0, 96], sizes = [8, 32], strides = [1, 1]} : vector<8x128xf32> to vector<8x32xf32>
    %82 = arith.addf %78, %79 : vector<8x32xf32>
    %83 = arith.addf %80, %81 : vector<8x32xf32>
    %84 = arith.addf %82, %83 : vector<8x32xf32>
    %85 = arith.index_cast %69 : i32 to index
    %c0_66 = arith.constant 0 : index
    %86 = vector.load %arg23[%85, %c0_66] : memref<32x32xf32, #tpu.memory_space<vmem>>, vector<8x32xf32>
    tpu.vector_store %arg23[%85, %c0_66], %84 {strides = array<i32>} : memref<32x32xf32, #tpu.memory_space<vmem>>, vector<8x32xf32>,
    %c1_i32_67 = arith.constant 1 : i32
    %c8_i32_68 = arith.constant 8 : i32
    %87 = arith.muli %c1_i32_67, %c8_i32_68 : i32
    %88 = tpu.assume_multiple %87, 8 : i32
    %89 = arith.index_cast %88 : i32 to index
    %c0_69 = arith.constant 0 : index
    %90 = vector.load %arg20[%89, %c0_69] : memref<32x128xf32, #tpu.memory_space<vmem>>, vector<8x128xf32>
    %cst_70 = arith.constant dense<0.000000e+00> : vector<8x128xf32>
    %91 = tpu.matmul %84, %6, %cst_70 {dimension_numbers = #tpu.dot_dimension_numbers<[1], [0], [0], [1], [0, 0, 1, 1], [], []>} : vector<8x32xf32>, vector<32x128xf32>, vector<8x128xf32> -> vector<8x128xf32>
    %92 = arith.addf %90, %91 : vector<8x128xf32>
    %93 = math.tanh %92 : vector<8x128xf32>
    %94 = arith.index_cast %88 : i32 to index
    %c0_71 = arith.constant 0 : index
    %95 = vector.load %arg21[%94, %c0_71] : memref<32x128xf32, #tpu.memory_space<vmem>>, vector<8x128xf32>
    %96 = arith.mulf %93, %95 : vector<8x128xf32>
    %97 = vector.extract_strided_slice %96 {offsets = [0, 0], sizes = [8, 32], strides = [1, 1]} : vector<8x128xf32> to vector<8x32xf32>
    %98 = vector.extract_strided_slice %96 {offsets = [0, 32], sizes = [8, 32], strides = [1, 1]} : vector<8x128xf32> to vector<8x32xf32>
    %99 = vector.extract_strided_slice %96 {offsets = [0, 64], sizes = [8, 32], strides = [1, 1]} : vector<8x128xf32> to vector<8x32xf32>
    %100 = vector.extract_strided_slice %96 {offsets = [0, 96], sizes = [8, 32], strides = [1, 1]} : vector<8x128xf32> to vector<8x32xf32>
    %101 = arith.addf %97, %98 : vector<8x32xf32>
    %102 = arith.addf %99, %100 : vector<8x32xf32>
    %103 = arith.addf %101, %102 : vector<8x32xf32>
    %104 = arith.index_cast %88 : i32 to index
    %c0_72 = arith.constant 0 : index
    %105 = vector.load %arg23[%104, %c0_72] : memref<32x32xf32, #tpu.memory_space<vmem>>, vector<8x32xf32>
    tpu.vector_store %arg23[%104, %c0_72], %103 {strides = array<i32>} : memref<32x32xf32, #tpu.memory_space<vmem>>, vector<8x32xf32>,
    %c2_i32_73 = arith.constant 2 : i32
    %c8_i32_74 = arith.constant 8 : i32
    %106 = arith.muli %c2_i32_73, %c8_i32_74 : i32
    %107 = tpu.assume_multiple %106, 8 : i32
    %108 = arith.index_cast %107 : i32 to index
    %c0_75 = arith.constant 0 : index
    %109 = vector.load %arg20[%108, %c0_75] : memref<32x128xf32, #tpu.memory_space<vmem>>, vector<8x128xf32>
    %cst_76 = arith.constant dense<0.000000e+00> : vector<8x128xf32>
    %110 = tpu.matmul %103, %6, %cst_76 {dimension_numbers = #tpu.dot_dimension_numbers<[1], [0], [0], [1], [0, 0, 1, 1], [], []>} : vector<8x32xf32>, vector<32x128xf32>, vector<8x128xf32> -> vector<8x128xf32>
    %111 = arith.addf %109, %110 : vector<8x128xf32>
    %112 = math.tanh %111 : vector<8x128xf32>
    %113 = arith.index_cast %107 : i32 to index
    %c0_77 = arith.constant 0 : index
    %114 = vector.load %arg21[%113, %c0_77] : memref<32x128xf32, #tpu.memory_space<vmem>>, vector<8x128xf32>
    %115 = arith.mulf %112, %114 : vector<8x128xf32>
    %116 = vector.extract_strided_slice %115 {offsets = [0, 0], sizes = [8, 32], strides = [1, 1]} : vector<8x128xf32> to vector<8x32xf32>
    %117 = vector.extract_strided_slice %115 {offsets = [0, 32], sizes = [8, 32], strides = [1, 1]} : vector<8x128xf32> to vector<8x32xf32>
    %118 = vector.extract_strided_slice %115 {offsets = [0, 64], sizes = [8, 32], strides = [1, 1]} : vector<8x128xf32> to vector<8x32xf32>
    %119 = vector.extract_strided_slice %115 {offsets = [0, 96], sizes = [8, 32], strides = [1, 1]} : vector<8x128xf32> to vector<8x32xf32>
    %120 = arith.addf %116, %117 : vector<8x32xf32>
    %121 = arith.addf %118, %119 : vector<8x32xf32>
    %122 = arith.addf %120, %121 : vector<8x32xf32>
    %123 = arith.index_cast %107 : i32 to index
    %c0_78 = arith.constant 0 : index
    %124 = vector.load %arg23[%123, %c0_78] : memref<32x32xf32, #tpu.memory_space<vmem>>, vector<8x32xf32>
    tpu.vector_store %arg23[%123, %c0_78], %122 {strides = array<i32>} : memref<32x32xf32, #tpu.memory_space<vmem>>, vector<8x32xf32>,
    %c3_i32 = arith.constant 3 : i32
    %c8_i32_79 = arith.constant 8 : i32
    %125 = arith.muli %c3_i32, %c8_i32_79 : i32
    %126 = tpu.assume_multiple %125, 8 : i32
    %127 = arith.index_cast %126 : i32 to index
    %c0_80 = arith.constant 0 : index
    %128 = vector.load %arg20[%127, %c0_80] : memref<32x128xf32, #tpu.memory_space<vmem>>, vector<8x128xf32>
    %cst_81 = arith.constant dense<0.000000e+00> : vector<8x128xf32>
    %129 = tpu.matmul %122, %6, %cst_81 {dimension_numbers = #tpu.dot_dimension_numbers<[1], [0], [0], [1], [0, 0, 1, 1], [], []>} : vector<8x32xf32>, vector<32x128xf32>, vector<8x128xf32> -> vector<8x128xf32>
    %130 = arith.addf %128, %129 : vector<8x128xf32>
    %131 = math.tanh %130 : vector<8x128xf32>
    %132 = arith.index_cast %126 : i32 to index
    %c0_82 = arith.constant 0 : index
    %133 = vector.load %arg21[%132, %c0_82] : memref<32x128xf32, #tpu.memory_space<vmem>>, vector<8x128xf32>
    %134 = arith.mulf %131, %133 : vector<8x128xf32>
    %135 = vector.extract_strided_slice %134 {offsets = [0, 0], sizes = [8, 32], strides = [1, 1]} : vector<8x128xf32> to vector<8x32xf32>
    %136 = vector.extract_strided_slice %134 {offsets = [0, 32], sizes = [8, 32], strides = [1, 1]} : vector<8x128xf32> to vector<8x32xf32>
    %137 = vector.extract_strided_slice %134 {offsets = [0, 64], sizes = [8, 32], strides = [1, 1]} : vector<8x128xf32> to vector<8x32xf32>
    %138 = vector.extract_strided_slice %134 {offsets = [0, 96], sizes = [8, 32], strides = [1, 1]} : vector<8x128xf32> to vector<8x32xf32>
    %139 = arith.addf %135, %136 : vector<8x32xf32>
    %140 = arith.addf %137, %138 : vector<8x32xf32>
    %141 = arith.addf %139, %140 : vector<8x32xf32>
    %142 = arith.index_cast %126 : i32 to index
    %c0_83 = arith.constant 0 : index
    %143 = vector.load %arg23[%142, %c0_83] : memref<32x32xf32, #tpu.memory_space<vmem>>, vector<8x32xf32>
    tpu.vector_store %arg23[%142, %c0_83], %141 {strides = array<i32>} : memref<32x32xf32, #tpu.memory_space<vmem>>, vector<8x32xf32>,
    %c4_i32_84 = arith.constant 4 : i32
    %c0_85 = arith.constant 0 : index
    %c0_86 = arith.constant 0 : index
    %144 = vector.load %arg24[%c0_85, %c0_86] : memref<8x32xf32, #tpu.memory_space<vmem>>, vector<8x32xf32>
    tpu.vector_store %arg24[%c0_85, %c0_86], %141 {strides = array<i32>} : memref<8x32xf32, #tpu.memory_space<vmem>>, vector<8x32xf32>,
    %c0_87 = arith.constant 0 : index
    %c0_88 = arith.constant 0 : index
    %145 = vector.load %arg23[%c0_87, %c0_88] : memref<32x32xf32, #tpu.memory_space<vmem>>, vector<32x32xf32>
    %cst_89 = arith.constant dense<0.000000e+00> : vector<32x32xf32>
    %146 = tpu.matmul %145, %11, %cst_89 {dimension_numbers = #tpu.dot_dimension_numbers<[1], [0], [0], [1], [0, 0, 1, 1], [], []>} : vector<32x32xf32>, vector<32x32xf32>, vector<32x32xf32> -> vector<32x32xf32>
    %147 = vector.broadcast %12 : vector<1x32xf32> to vector<32x32xf32>
    %148 = arith.addf %146, %147 : vector<32x32xf32>
    %cst_90 = arith.constant 0.000000e+00 : f32
    %149 = vector.broadcast %cst_90 : f32 to vector<32x32xf32>
    %150 = arith.maximumf %148, %149 : vector<32x32xf32>
    %cst_91 = arith.constant dense<0.000000e+00> : vector<32x128xf32>
    %151 = tpu.matmul %150, %13, %cst_91 {dimension_numbers = #tpu.dot_dimension_numbers<[1], [0], [0], [1], [0, 0, 1, 1], [], []>} : vector<32x32xf32>, vector<32x128xf32>, vector<32x128xf32> -> vector<32x128xf32>
    %152 = vector.broadcast %14 : vector<1x128xf32> to vector<32x128xf32>
    %153 = arith.addf %151, %152 : vector<32x128xf32>
    %c0_92 = arith.constant 0 : index
    %c0_93 = arith.constant 0 : index
    %154 = vector.load %arg19[%c0_92, %c0_93] : memref<32x128xf32, #tpu.memory_space<vmem>>, vector<32x128xf32>
    tpu.vector_store %arg19[%c0_92, %c0_93], %153 {strides = array<i32>} : memref<32x128xf32, #tpu.memory_space<vmem>>, vector<32x128xf32>,
    return
  }
  func.func @transform_0(%arg0: i32) -> (i32, i32) {
    %c0_i32 = arith.constant 0 : i32
    %c0_i32_0 = arith.constant 0 : i32
    return %arg0, %c0_i32 : i32, i32
  }
  func.func @transform_1(%arg0: i32) -> (i32, i32) {
    %c0_i32 = arith.constant 0 : i32
    %c0_i32_0 = arith.constant 0 : i32
    return %arg0, %c0_i32 : i32, i32
  }
  func.func @transform_2(%arg0: i32) -> (i32, i32) {
    %c0_i32 = arith.constant 0 : i32
    %c0_i32_0 = arith.constant 0 : i32
    %c0_i32_1 = arith.constant 0 : i32
    return %c0_i32, %c0_i32_0 : i32, i32
  }
  func.func @transform_3(%arg0: i32) -> (i32, i32) {
    %c0_i32 = arith.constant 0 : i32
    %c0_i32_0 = arith.constant 0 : i32
    %c0_i32_1 = arith.constant 0 : i32
    return %c0_i32, %c0_i32_0 : i32, i32
  }
  func.func @transform_4(%arg0: i32) -> (i32, i32) {
    %c0_i32 = arith.constant 0 : i32
    %c0_i32_0 = arith.constant 0 : i32
    %c0_i32_1 = arith.constant 0 : i32
    return %c0_i32, %c0_i32_0 : i32, i32
  }
  func.func @transform_5(%arg0: i32) -> (i32, i32) {
    %c0_i32 = arith.constant 0 : i32
    %c0_i32_0 = arith.constant 0 : i32
    %c0_i32_1 = arith.constant 0 : i32
    return %c0_i32, %c0_i32_0 : i32, i32
  }
  func.func @transform_6(%arg0: i32) -> (i32, i32) {
    %c0_i32 = arith.constant 0 : i32
    %c0_i32_0 = arith.constant 0 : i32
    %c0_i32_1 = arith.constant 0 : i32
    return %c0_i32, %c0_i32_0 : i32, i32
  }
  func.func @transform_7(%arg0: i32) -> (i32, i32) {
    %c0_i32 = arith.constant 0 : i32
    %c0_i32_0 = arith.constant 0 : i32
    %c0_i32_1 = arith.constant 0 : i32
    return %c0_i32, %c0_i32_0 : i32, i32
  }
  func.func @transform_8(%arg0: i32) -> (i32, i32) {
    %c0_i32 = arith.constant 0 : i32
    %c0_i32_0 = arith.constant 0 : i32
    %c0_i32_1 = arith.constant 0 : i32
    return %c0_i32, %c0_i32_0 : i32, i32
  }
  func.func @transform_9(%arg0: i32) -> (i32, i32) {
    %c0_i32 = arith.constant 0 : i32
    %c0_i32_0 = arith.constant 0 : i32
    %c0_i32_1 = arith.constant 0 : i32
    return %c0_i32, %c0_i32_0 : i32, i32
  }
  func.func @transform_10(%arg0: i32) -> (i32, i32) {
    %c0_i32 = arith.constant 0 : i32
    %c0_i32_0 = arith.constant 0 : i32
    %c0_i32_1 = arith.constant 0 : i32
    return %c0_i32, %c0_i32_0 : i32, i32
  }
  func.func @transform_11(%arg0: i32) -> (i32, i32) {
    %c0_i32 = arith.constant 0 : i32
    %c0_i32_0 = arith.constant 0 : i32
    %c0_i32_1 = arith.constant 0 : i32
    return %c0_i32, %c0_i32_0 : i32, i32
  }
  func.func @transform_12(%arg0: i32) -> (i32, i32) {
    %c0_i32 = arith.constant 0 : i32
    %c0_i32_0 = arith.constant 0 : i32
    %c0_i32_1 = arith.constant 0 : i32
    return %c0_i32, %c0_i32_0 : i32, i32
  }
  func.func @transform_13(%arg0: i32) -> (i32, i32) {
    %c0_i32 = arith.constant 0 : i32
    %c0_i32_0 = arith.constant 0 : i32
    %c0_i32_1 = arith.constant 0 : i32
    return %c0_i32, %c0_i32_0 : i32, i32
  }
  func.func @transform_14(%arg0: i32) -> (i32, i32) {
    %c0_i32 = arith.constant 0 : i32
    %c0_i32_0 = arith.constant 0 : i32
    %c0_i32_1 = arith.constant 0 : i32
    return %c0_i32, %c0_i32_0 : i32, i32
  }
  func.func @transform_15(%arg0: i32) -> (i32, i32) {
    %c0_i32 = arith.constant 0 : i32
    %c0_i32_0 = arith.constant 0 : i32
    %c0_i32_1 = arith.constant 0 : i32
    return %c0_i32, %c0_i32_0 : i32, i32
  }
  func.func @transform_16(%arg0: i32) -> (i32, i32) {
    %c0_i32 = arith.constant 0 : i32
    %c0_i32_0 = arith.constant 0 : i32
    %c0_i32_1 = arith.constant 0 : i32
    return %c0_i32, %c0_i32_0 : i32, i32
  }
  func.func @transform_17(%arg0: i32) -> (i32, i32) {
    %c0_i32 = arith.constant 0 : i32
    %c0_i32_0 = arith.constant 0 : i32
    %c0_i32_1 = arith.constant 0 : i32
    return %c0_i32, %c0_i32_0 : i32, i32
  }
  func.func @transform_18(%arg0: i32) -> (i32, i32) {
    %c0_i32 = arith.constant 0 : i32
    %c0_i32_0 = arith.constant 0 : i32
    return %arg0, %c0_i32 : i32, i32
  }
}

</mosaic_0001>

<llo_original>
// kernel: tpu_custom_call.1
$region0: #{tpu_custom_call.1}
  #allocation0 [shape = 'u32[]', space=smem, size = 0x4, offset = 0x4, fixed_abs, tag = 'smem constant byte address 0x4 - core index']
  #allocation1 [shape = 'u32[144,128]{1,0:T(1,128)}', space=vmem, size = 0x12000, scoped, tag = 'internal scratch']
  #allocation2 [shape = 'f32[32,128]{1,0:T(8,128)}', space=vmem, size = 0x4000, scoped, tag = 'scratch operand']
  #allocation3 [shape = 'f32[32,128]{1,0:T(8,128)}', space=vmem, size = 0x4000, scoped, tag = 'scratch operand']
  #allocation4 [shape = 'f32[32,4]{1,0:T(8,128)}', space=vmem, size = 0x4000, scoped, tag = 'scratch operand']
  #allocation5 [shape = 'f32[32,32]{1,0:T(8,128)}', space=vmem, size = 0x4000, scoped, tag = 'scratch operand']
  #allocation6 [shape = 'f32[8,32]{1,0:T(8,128)}', space=vmem, size = 0x1000, scoped, tag = 'scratch operand']
  %s0 = inlined_call_operand.vmem [shape: f32[64,4], index: 0, kind: input, shape index: {}]
  %s1 = inlined_call_operand.vmem [shape: f32[64,4], index: 1, kind: input, shape index: {}]
  %s2 = inlined_call_operand.vmem [shape: f32[4,16], index: 2, kind: input, shape index: {}]
  %s3 = inlined_call_operand.vmem [shape: f32[1,16], index: 3, kind: input, shape index: {}]
  %s4 = inlined_call_operand.vmem [shape: f32[16,16], index: 4, kind: input, shape index: {}]
  %s5 = inlined_call_operand.vmem [shape: f32[1,16], index: 5, kind: input, shape index: {}]
  %s6 = inlined_call_operand.vmem [shape: f32[16,128], index: 6, kind: input, shape index: {}]
  %s7 = inlined_call_operand.vmem [shape: f32[1,128], index: 7, kind: input, shape index: {}]
  %s8 = inlined_call_operand.vmem [shape: f32[32,128], index: 8, kind: input, shape index: {}]
  %s9 = inlined_call_operand.vmem [shape: f32[4,32], index: 9, kind: input, shape index: {}]
  %s10 = inlined_call_operand.vmem [shape: f32[1,32], index: 10, kind: input, shape index: {}]
  %s11 = inlined_call_operand.vmem [shape: f32[32,4], index: 11, kind: input, shape index: {}]
  %s12 = inlined_call_operand.vmem [shape: f32[1,4], index: 12, kind: input, shape index: {}]
  %s13 = inlined_call_operand.vmem [shape: f32[32,32], index: 13, kind: input, shape index: {}]
  %s14 = inlined_call_operand.vmem [shape: f32[1,32], index: 14, kind: input, shape index: {}]
  %s15 = inlined_call_operand.vmem [shape: f32[32,128], index: 15, kind: input, shape index: {}]
  %s16 = inlined_call_operand.vmem [shape: f32[1,128], index: 16, kind: input, shape index: {}]
  %s17 = inlined_call_operand.vmem [shape: f32[4,128], index: 17, kind: input, shape index: {}]
  %s18 = inlined_call_operand.hbm [shape: f32[64,128], index: 18, kind: output, shape index: {}]
  %s19 = sld [smem:[#allocation0]]
  $region116: #{tpu_custom_call.1} parent=0
    _
  %s21 = ssub.s32 1, %s19
  %s22 = scalar_select 0, %s21, %s19
  $region1: #{tpu_custom_call.1} parent=0
    #allocation7 [shape = 'u8[32768]{0}', space=vmem, size = 0x8000, scoped, tag = 'output window, operand 0']
    #allocation8 [shape = 's32[2]{0}', space=sflag, size = 0x8, scoped, tag = 'scoped memory for tpu_custom_call.1']
    %23 = vsyncpa [#allocation8], 0
    %s24 = scalar_lea.sflag [#allocation8], 1
    %25 = vsyncpa %s24, 0
    loop: start=0, step=1, limit=4
    $region2: #{tpu_custom_call.1} parent=1 // loop_pre_header
      _
    $region3: #{tpu_custom_call.1} parent=1 // loop_header
      %s27 = sphi 0, %s31
      %p28 = scmp.ge.s32.totalorder %s27, 4
      %s37 = sphi 0, %s39
      %s40 = sphi 0, %s37
      %s41 = sphi 0, %s40
      %s57 = sphi 0, %s41
      %s63 = sphi 0, %s65
      %s66 = sphi 0, %s63
      %s67 = sphi 0, %s66
      %s83 = sphi 0, %s67
      %s87 = sphi 0, %s87
      %s89 = sphi 0, %s87
      %s90 = sphi 0, %s89
      %s104 = sphi 0, %s90
      %s108 = sphi 0, %s108
      %s110 = sphi 0, %s108
      %s111 = sphi 0, %s110
      %s125 = sphi 0, %s111
      %s129 = sphi 0, %s129
      %s131 = sphi 0, %s129
      %s132 = sphi 0, %s131
      %s146 = sphi 0, %s132
      %s150 = sphi 0, %s150
      %s152 = sphi 0, %s150
      %s153 = sphi 0, %s152
      %s167 = sphi 0, %s153
      %s171 = sphi 0, %s171
      %s173 = sphi 0, %s171
      %s174 = sphi 0, %s173
      %s188 = sphi 0, %s174
      %s192 = sphi 0, %s192
      %s194 = sphi 0, %s192
      %s195 = sphi 0, %s194
      %s209 = sphi 0, %s195
      %s213 = sphi 0, %s213
      %s215 = sphi 0, %s213
      %s216 = sphi 0, %s215
      %s230 = sphi 0, %s216
      %s234 = sphi 0, %s234
      %s236 = sphi 0, %s234
      %s237 = sphi 0, %s236
      %s251 = sphi 0, %s237
      %s255 = sphi 0, %s255
      %s257 = sphi 0, %s255
      %s258 = sphi 0, %s257
      %s272 = sphi 0, %s258
      %s276 = sphi 0, %s276
      %s278 = sphi 0, %s276
      %s279 = sphi 0, %s278
      %s293 = sphi 0, %s279
      %s297 = sphi 0, %s297
      %s299 = sphi 0, %s297
      %s300 = sphi 0, %s299
      %s314 = sphi 0, %s300
      %s318 = sphi 0, %s318
      %s320 = sphi 0, %s318
      %s321 = sphi 0, %s320
      %s335 = sphi 0, %s321
      %s339 = sphi 0, %s339
      %s341 = sphi 0, %s339
      %s342 = sphi 0, %s341
      %s356 = sphi 0, %s342
      %s360 = sphi 0, %s360
      %s362 = sphi 0, %s360
      %s363 = sphi 0, %s362
      %s377 = sphi 0, %s363
      %s381 = sphi 0, %s381
      %s383 = sphi 0, %s381
      %s384 = sphi 0, %s383
      %s398 = sphi 0, %s384
      %s402 = sphi 0, %s402
      %s404 = sphi 0, %s402
      %s405 = sphi 0, %s404
      %s419 = sphi 0, %s405
      %s425 = sphi 0, %s427
      %s428 = sphi 0, %s425
      %s429 = sphi 0, %s428
      %s445 = sphi 0, %s429
    $region4: #{tpu_custom_call.1} parent=1 // loop_header_branch
      %30 = sbr.rel (%p28) target = $region8
    $region5: #{tpu_custom_call.1} parent=1 // loop_body
      %s32 = ssub.s32 %s27, 1
      %s33 = ssub.s32 %s27, 2
      %s34 = sadd.s32 %s27, 1
      %s35 = ssub.s32 %s27, %s34
      %p36 = scmp.eq.s32.totalorder %s35, 0
      %s38 = sadd.s32 %s37, 1
      %s39 = scalar_select %p36, %s37, %s38
      %p42 = pneg %p36
      %p43 = scmp.eq.s32.totalorder %s27, 1
      %p44 = por %p42, %p43
      %p45 = scmp.ne.s32.totalorder %s37, %s40
      %p46 = scmp.eq.s32.totalorder %s27, 0
      %p47 = por %p45, %p46
      %p48 = scmp.ne.s32.totalorder %s37, %s40
      %p49 = scmp.eq.s32.totalorder %s32, 1
      %p50 = por %p48, %p49
      %p51 = scmp.ne.s32.totalorder %s40, %s41
      %p52 = scmp.eq.s32.totalorder %s32, 0
      %p53 = por %p51, %p52
      %p54 = scmp.ne.s32.totalorder %s40, %s41
      %p55 = scmp.eq.s32.totalorder %s33, 1
      %p56 = por %p54, %p55
      %p58 = scmp.ne.s32.totalorder %s41, %s57
      %p59 = scmp.eq.s32.totalorder %s33, 0
      %p60 = por %p58, %p59
      %s61 = ssub.s32 %s27, %s34
      %p62 = scmp.eq.s32.totalorder %s61, 0
      %s64 = sadd.s32 %s63, 1
      %s65 = scalar_select %p62, %s63, %s64
      %p68 = pneg %p62
      %p69 = scmp.eq.s32.totalorder %s27, 1
      %p70 = por %p68, %p69
      %p71 = scmp.ne.s32.totalorder %s63, %s66
      %p72 = scmp.eq.s32.totalorder %s27, 0
      %p73 = por %p71, %p72
      %p74 = scmp.ne.s32.totalorder %s63, %s66
      %p75 = scmp.eq.s32.totalorder %s32, 1
      %p76 = por %p74, %p75
      %p77 = scmp.ne.s32.totalorder %s66, %s67
      %p78 = scmp.eq.s32.totalorder %s32, 0
      %p79 = por %p77, %p78
      %p80 = scmp.ne.s32.totalorder %s66, %s67
      %p81 = scmp.eq.s32.totalorder %s33, 1
      %p82 = por %p80, %p81
      %p84 = scmp.ne.s32.totalorder %s67, %s83
      %p85 = scmp.eq.s32.totalorder %s33, 0
      %p86 = por %p84, %p85
      %s88 = sadd.s32 %s87, 1
      %p91 = scmp.eq.s32.totalorder %s27, 1
      %p92 = scmp.ne.s32.totalorder %s87, %s89
      %p93 = scmp.eq.s32.totalorder %s27, 0
      %p94 = por %p92, %p93
      %p95 = scmp.ne.s32.totalorder %s87, %s89
      %p96 = scmp.eq.s32.totalorder %s32, 1
      %p97 = por %p95, %p96
      %p98 = scmp.ne.s32.totalorder %s89, %s90
      %p99 = scmp.eq.s32.totalorder %s32, 0
      %p100 = por %p98, %p99
      %p101 = scmp.ne.s32.totalorder %s89, %s90
      %p102 = scmp.eq.s32.totalorder %s33, 1
      %p103 = por %p101, %p102
      %p105 = scmp.ne.s32.totalorder %s90, %s104
      %p106 = scmp.eq.s32.totalorder %s33, 0
      %p107 = por %p105, %p106
      %s109 = sadd.s32 %s108, 1
      %p112 = scmp.eq.s32.totalorder %s27, 1
      %p113 = scmp.ne.s32.totalorder %s108, %s110
      %p114 = scmp.eq.s32.totalorder %s27, 0
      %p115 = por %p113, %p114
      %p116 = scmp.ne.s32.totalorder %s108, %s110
      %p117 = scmp.eq.s32.totalorder %s32, 1
      %p118 = por %p116, %p117
      %p119 = scmp.ne.s32.totalorder %s110, %s111
      %p120 = scmp.eq.s32.totalorder %s32, 0
      %p121 = por %p119, %p120
      %p122 = scmp.ne.s32.totalorder %s110, %s111
      %p123 = scmp.eq.s32.totalorder %s33, 1
      %p124 = por %p122, %p123
      %p126 = scmp.ne.s32.totalorder %s111, %s125
      %p127 = scmp.eq.s32.totalorder %s33, 0
      %p128 = por %p126, %p127
      %s130 = sadd.s32 %s129, 1
      %p133 = scmp.eq.s32.totalorder %s27, 1
      %p134 = scmp.ne.s32.totalorder %s129, %s131
      %p135 = scmp.eq.s32.totalorder %s27, 0
      %p136 = por %p134, %p135
      %p137 = scmp.ne.s32.totalorder %s129, %s131
      %p138 = scmp.eq.s32.totalorder %s32, 1
      %p139 = por %p137, %p138
      %p140 = scmp.ne.s32.totalorder %s131, %s132
      %p141 = scmp.eq.s32.totalorder %s32, 0
      %p142 = por %p140, %p141
      %p143 = scmp.ne.s32.totalorder %s131, %s132
      %p144 = scmp.eq.s32.totalorder %s33, 1
      %p145 = por %p143, %p144
      %p147 = scmp.ne.s32.totalorder %s132, %s146
      %p148 = scmp.eq.s32.totalorder %s33, 0
      %p149 = por %p147, %p148
      %s151 = sadd.s32 %s150, 1
      %p154 = scmp.eq.s32.totalorder %s27, 1
      %p155 = scmp.ne.s32.totalorder %s150, %s152
      %p156 = scmp.eq.s32.totalorder %s27, 0
      %p157 = por %p155, %p156
      %p158 = scmp.ne.s32.totalorder %s150, %s152
      %p159 = scmp.eq.s32.totalorder %s32, 1
      %p160 = por %p158, %p159
      %p161 = scmp.ne.s32.totalorder %s152, %s153
      %p162 = scmp.eq.s32.totalorder %s32, 0
      %p163 = por %p161, %p162
      %p164 = scmp.ne.s32.totalorder %s152, %s153
      %p165 = scmp.eq.s32.totalorder %s33, 1
      %p166 = por %p164, %p165
      %p168 = scmp.ne.s32.totalorder %s153, %s167
      %p169 = scmp.eq.s32.totalorder %s33, 0
      %p170 = por %p168, %p169
      %s172 = sadd.s32 %s171, 1
      %p175 = scmp.eq.s32.totalorder %s27, 1
      %p176 = scmp.ne.s32.totalorder %s171, %s173
      %p177 = scmp.eq.s32.totalorder %s27, 0
      %p178 = por %p176, %p177
      %p179 = scmp.ne.s32.totalorder %s171, %s173
      %p180 = scmp.eq.s32.totalorder %s32, 1
      %p181 = por %p179, %p180
      %p182 = scmp.ne.s32.totalorder %s173, %s174
      %p183 = scmp.eq.s32.totalorder %s32, 0
      %p184 = por %p182, %p183
      %p185 = scmp.ne.s32.totalorder %s173, %s174
      %p186 = scmp.eq.s32.totalorder %s33, 1
      %p187 = por %p185, %p186
      %p189 = scmp.ne.s32.totalorder %s174, %s188
      %p190 = scmp.eq.s32.totalorder %s33, 0
      %p191 = por %p189, %p190
      %s193 = sadd.s32 %s192, 1
      %p196 = scmp.eq.s32.totalorder %s27, 1
      %p197 = scmp.ne.s32.totalorder %s192, %s194
      %p198 = scmp.eq.s32.totalorder %s27, 0
      %p199 = por %p197, %p198
      %p200 = scmp.ne.s32.totalorder %s192, %s194
      %p201 = scmp.eq.s32.totalorder %s32, 1
      %p202 = por %p200, %p201
      %p203 = scmp.ne.s32.totalorder %s194, %s195
      %p204 = scmp.eq.s32.totalorder %s32, 0
      %p205 = por %p203, %p204
      %p206 = scmp.ne.s32.totalorder %s194, %s195
      %p207 = scmp.eq.s32.totalorder %s33, 1
      %p208 = por %p206, %p207
      %p210 = scmp.ne.s32.totalorder %s195, %s209
      %p211 = scmp.eq.s32.totalorder %s33, 0
      %p212 = por %p210, %p211
      %s214 = sadd.s32 %s213, 1
      %p217 = scmp.eq.s32.totalorder %s27, 1
      %p218 = scmp.ne.s32.totalorder %s213, %s215
      %p219 = scmp.eq.s32.totalorder %s27, 0
      %p220 = por %p218, %p219
      %p221 = scmp.ne.s32.totalorder %s213, %s215
      %p222 = scmp.eq.s32.totalorder %s32, 1
      %p223 = por %p221, %p222
      %p224 = scmp.ne.s32.totalorder %s215, %s216
      %p225 = scmp.eq.s32.totalorder %s32, 0
      %p226 = por %p224, %p225
      %p227 = scmp.ne.s32.totalorder %s215, %s216
      %p228 = scmp.eq.s32.totalorder %s33, 1
      %p229 = por %p227, %p228
      %p231 = scmp.ne.s32.totalorder %s216, %s230
      %p232 = scmp.eq.s32.totalorder %s33, 0
      %p233 = por %p231, %p232
      %s235 = sadd.s32 %s234, 1
      %p238 = scmp.eq.s32.totalorder %s27, 1
      %p239 = scmp.ne.s32.totalorder %s234, %s236
      %p240 = scmp.eq.s32.totalorder %s27, 0
      %p241 = por %p239, %p240
      %p242 = scmp.ne.s32.totalorder %s234, %s236
      %p243 = scmp.eq.s32.totalorder %s32, 1
      %p244 = por %p242, %p243
      %p245 = scmp.ne.s32.totalorder %s236, %s237
      %p246 = scmp.eq.s32.totalorder %s32, 0
      %p247 = por %p245, %p246
      %p248 = scmp.ne.s32.totalorder %s236, %s237
      %p249 = scmp.eq.s32.totalorder %s33, 1
      %p250 = por %p248, %p249
      %p252 = scmp.ne.s32.totalorder %s237, %s251
      %p253 = scmp.eq.s32.totalorder %s33, 0
      %p254 = por %p252, %p253
      %s256 = sadd.s32 %s255, 1
      %p259 = scmp.eq.s32.totalorder %s27, 1
      %p260 = scmp.ne.s32.totalorder %s255, %s257
      %p261 = scmp.eq.s32.totalorder %s27, 0
      %p262 = por %p260, %p261
      %p263 = scmp.ne.s32.totalorder %s255, %s257
      %p264 = scmp.eq.s32.totalorder %s32, 1
      %p265 = por %p263, %p264
      %p266 = scmp.ne.s32.totalorder %s257, %s258
      %p267 = scmp.eq.s32.totalorder %s32, 0
      %p268 = por %p266, %p267
      %p269 = scmp.ne.s32.totalorder %s257, %s258
      %p270 = scmp.eq.s32.totalorder %s33, 1
      %p271 = por %p269, %p270
      %p273 = scmp.ne.s32.totalorder %s258, %s272
      %p274 = scmp.eq.s32.totalorder %s33, 0
      %p275 = por %p273, %p274
      %s277 = sadd.s32 %s276, 1
      %p280 = scmp.eq.s32.totalorder %s27, 1
      %p281 = scmp.ne.s32.totalorder %s276, %s278
      %p282 = scmp.eq.s32.totalorder %s27, 0
      %p283 = por %p281, %p282
      %p284 = scmp.ne.s32.totalorder %s276, %s278
      %p285 = scmp.eq.s32.totalorder %s32, 1
      %p286 = por %p284, %p285
      %p287 = scmp.ne.s32.totalorder %s278, %s279
      %p288 = scmp.eq.s32.totalorder %s32, 0
      %p289 = por %p287, %p288
      %p290 = scmp.ne.s32.totalorder %s278, %s279
      %p291 = scmp.eq.s32.totalorder %s33, 1
      %p292 = por %p290, %p291
      %p294 = scmp.ne.s32.totalorder %s279, %s293
      %p295 = scmp.eq.s32.totalorder %s33, 0
      %p296 = por %p294, %p295
      %s298 = sadd.s32 %s297, 1
      %p301 = scmp.eq.s32.totalorder %s27, 1
      %p302 = scmp.ne.s32.totalorder %s297, %s299
      %p303 = scmp.eq.s32.totalorder %s27, 0
      %p304 = por %p302, %p303
      %p305 = scmp.ne.s32.totalorder %s297, %s299
      %p306 = scmp.eq.s32.totalorder %s32, 1
      %p307 = por %p305, %p306
      %p308 = scmp.ne.s32.totalorder %s299, %s300
      %p309 = scmp.eq.s32.totalorder %s32, 0
      %p310 = por %p308, %p309
      %p311 = scmp.ne.s32.totalorder %s299, %s300
      %p312 = scmp.eq.s32.totalorder %s33, 1
      %p313 = por %p311, %p312
      %p315 = scmp.ne.s32.totalorder %s300, %s314
      %p316 = scmp.eq.s32.totalorder %s33, 0
      %p317 = por %p315, %p316
      %s319 = sadd.s32 %s318, 1
      %p322 = scmp.eq.s32.totalorder %s27, 1
      %p323 = scmp.ne.s32.totalorder %s318, %s320
      %p324 = scmp.eq.s32.totalorder %s27, 0
      %p325 = por %p323, %p324
      %p326 = scmp.ne.s32.totalorder %s318, %s320
      %p327 = scmp.eq.s32.totalorder %s32, 1
      %p328 = por %p326, %p327
      %p329 = scmp.ne.s32.totalorder %s320, %s321
      %p330 = scmp.eq.s32.totalorder %s32, 0
      %p331 = por %p329, %p330
      %p332 = scmp.ne.s32.totalorder %s320, %s321
      %p333 = scmp.eq.s32.totalorder %s33, 1
      %p334 = por %p332, %p333
      %p336 = scmp.ne.s32.totalorder %s321, %s335
      %p337 = scmp.eq.s32.totalorder %s33, 0
      %p338 = por %p336, %p337
      %s340 = sadd.s32 %s339, 1
      %p343 = scmp.eq.s32.totalorder %s27, 1
      %p344 = scmp.ne.s32.totalorder %s339, %s341
      %p345 = scmp.eq.s32.totalorder %s27, 0
      %p346 = por %p344, %p345
      %p347 = scmp.ne.s32.totalorder %s339, %s341
      %p348 = scmp.eq.s32.totalorder %s32, 1
      %p349 = por %p347, %p348
      %p350 = scmp.ne.s32.totalorder %s341, %s342
      %p351 = scmp.eq.s32.totalorder %s32, 0
      %p352 = por %p350, %p351
      %p353 = scmp.ne.s32.totalorder %s341, %s342
      %p354 = scmp.eq.s32.totalorder %s33, 1
      %p355 = por %p353, %p354
      %p357 = scmp.ne.s32.totalorder %s342, %s356
      %p358 = scmp.eq.s32.totalorder %s33, 0
      %p359 = por %p357, %p358
      %s361 = sadd.s32 %s360, 1
      %p364 = scmp.eq.s32.totalorder %s27, 1
      %p365 = scmp.ne.s32.totalorder %s360, %s362
      %p366 = scmp.eq.s32.totalorder %s27, 0
      %p367 = por %p365, %p366
      %p368 = scmp.ne.s32.totalorder %s360, %s362
      %p369 = scmp.eq.s32.totalorder %s32, 1
      %p370 = por %p368, %p369
      %p371 = scmp.ne.s32.totalorder %s362, %s363
      %p372 = scmp.eq.s32.totalorder %s32, 0
      %p373 = por %p371, %p372
      %p374 = scmp.ne.s32.totalorder %s362, %s363
      %p375 = scmp.eq.s32.totalorder %s33, 1
      %p376 = por %p374, %p375
      %p378 = scmp.ne.s32.totalorder %s363, %s377
      %p379 = scmp.eq.s32.totalorder %s33, 0
      %p380 = por %p378, %p379
      %s382 = sadd.s32 %s381, 1
      %p385 = scmp.eq.s32.totalorder %s27, 1
      %p386 = scmp.ne.s32.totalorder %s381, %s383
      %p387 = scmp.eq.s32.totalorder %s27, 0
      %p388 = por %p386, %p387
      %p389 = scmp.ne.s32.totalorder %s381, %s383
      %p390 = scmp.eq.s32.totalorder %s32, 1
      %p391 = por %p389, %p390
      %p392 = scmp.ne.s32.totalorder %s383, %s384
      %p393 = scmp.eq.s32.totalorder %s32, 0
      %p394 = por %p392, %p393
      %p395 = scmp.ne.s32.totalorder %s383, %s384
      %p396 = scmp.eq.s32.totalorder %s33, 1
      %p397 = por %p395, %p396
      %p399 = scmp.ne.s32.totalorder %s384, %s398
      %p400 = scmp.eq.s32.totalorder %s33, 0
      %p401 = por %p399, %p400
      %s403 = sadd.s32 %s402, 1
      %p406 = scmp.eq.s32.totalorder %s27, 1
      %p407 = scmp.ne.s32.totalorder %s402, %s404
      %p408 = scmp.eq.s32.totalorder %s27, 0
      %p409 = por %p407, %p408
      %p410 = scmp.ne.s32.totalorder %s402, %s404
      %p411 = scmp.eq.s32.totalorder %s32, 1
      %p412 = por %p410, %p411
      %p413 = scmp.ne.s32.totalorder %s404, %s405
      %p414 = scmp.eq.s32.totalorder %s32, 0
      %p415 = por %p413, %p414
      %p416 = scmp.ne.s32.totalorder %s404, %s405
      %p417 = scmp.eq.s32.totalorder %s33, 1
      %p418 = por %p416, %p417
      %p420 = scmp.ne.s32.totalorder %s405, %s419
      %p421 = scmp.eq.s32.totalorder %s33, 0
      %p422 = por %p420, %p421
      %s423 = ssub.s32 %s27, %s34
      %p424 = scmp.eq.s32.totalorder %s423, 0
      %s426 = sadd.s32 %s425, 1
      %s427 = scalar_select %p424, %s425, %s426
      %p430 = pneg %p424
      %p431 = scmp.eq.s32.totalorder %s27, 1
      %p432 = por %p430, %p431
      %p433 = scmp.ne.s32.totalorder %s425, %s428
      %p434 = scmp.eq.s32.totalorder %s27, 0
      %p435 = por %p433, %p434
      %p436 = scmp.ne.s32.totalorder %s425, %s428
      %p437 = scmp.eq.s32.totalorder %s32, 1
      %p438 = por %p436, %p437
      %p439 = scmp.ne.s32.totalorder %s428, %s429
      %p440 = scmp.eq.s32.totalorder %s32, 0
      %p441 = por %p439, %p440
      %p442 = scmp.ne.s32.totalorder %s428, %s429
      %p443 = scmp.eq.s32.totalorder %s33, 1
      %p444 = por %p442, %p443
      %p446 = scmp.ne.s32.totalorder %s429, %s445
      %p447 = scmp.eq.s32.totalorder %s33, 0
      %p448 = por %p446, %p447
      %p449 = scmp.le.s32.totalorder 1, %s27
      %p450 = scmp.lt.s32.totalorder %s27, 3
      %p451 = pnand %p449, %p450
      %p452 = pneg %p451
      // Predicated region
      $region9: #{tpu_custom_call.1} parent=5 // pred_check
        _
      $region10: #{tpu_custom_call.1} parent=5 // pred_check_branch
        %454 = sbr.rel (%p451) target = $region12
      $region11: #{tpu_custom_call.1} parent=5 // pred_region
        %s455 = ssub.s32 %s27, 1
        // Predicated region
        $region13: #{tpu_custom_call.1} parent=11 // pred_check
          %p456 = pneg %p100
        $region14: #{tpu_custom_call.1} parent=11 // pred_check_branch
          %458 = sbr.rel (%p456) target = $region16
        $region15: #{tpu_custom_call.1} parent=11 // pred_region
          _
        $region16: #{tpu_custom_call.1} parent=11 // pred_fallthru
          _
        // Predicated region
        $region17: #{tpu_custom_call.1} parent=11 // pred_check
          %p459 = pneg %p121
        $region18: #{tpu_custom_call.1} parent=11 // pred_check_branch
          %461 = sbr.rel (%p459) target = $region20
        $region19: #{tpu_custom_call.1} parent=11 // pred_region
          _
        $region20: #{tpu_custom_call.1} parent=11 // pred_fallthru
          _
        // Predicated region
        $region21: #{tpu_custom_call.1} parent=11 // pred_check
          %p462 = pneg %p142
        $region22: #{tpu_custom_call.1} parent=11 // pred_check_branch
          %464 = sbr.rel (%p462) target = $region24
        $region23: #{tpu_custom_call.1} parent=11 // pred_region
          _
        $region24: #{tpu_custom_call.1} parent=11 // pred_fallthru
          _
        // Predicated region
        $region25: #{tpu_custom_call.1} parent=11 // pred_check
          %p465 = pneg %p163
        $region26: #{tpu_custom_call.1} parent=11 // pred_check_branch
          %467 = sbr.rel (%p465) target = $region28
        $region27: #{tpu_custom_call.1} parent=11 // pred_region
          _
        $region28: #{tpu_custom_call.1} parent=11 // pred_fallthru
          _
        // Predicated region
        $region29: #{tpu_custom_call.1} parent=11 // pred_check
          %p468 = pneg %p184
        $region30: #{tpu_custom_call.1} parent=11 // pred_check_branch
          %470 = sbr.rel (%p468) target = $region32
        $region31: #{tpu_custom_call.1} parent=11 // pred_region
          _
        $region32: #{tpu_custom_call.1} parent=11 // pred_fallthru
          _
        // Predicated region
        $region33: #{tpu_custom_call.1} parent=11 // pred_check
          %p471 = pneg %p205
        $region34: #{tpu_custom_call.1} parent=11 // pred_check_branch
          %473 = sbr.rel (%p471) target = $region36
        $region35: #{tpu_custom_call.1} parent=11 // pred_region
          _
        $region36: #{tpu_custom_call.1} parent=11 // pred_fallthru
          _
        // Predicated region
        $region37: #{tpu_custom_call.1} parent=11 // pred_check
          %p474 = pneg %p226
        $region38: #{tpu_custom_call.1} parent=11 // pred_check_branch
          %476 = sbr.rel (%p474) target = $region40
        $region39: #{tpu_custom_call.1} parent=11 // pred_region
          _
        $region40: #{tpu_custom_call.1} parent=11 // pred_fallthru
          _
        // Predicated region
        $region41: #{tpu_custom_call.1} parent=11 // pred_check
          %p477 = pneg %p247
        $region42: #{tpu_custom_call.1} parent=11 // pred_check_branch
          %479 = sbr.rel (%p477) target = $region44
        $region43: #{tpu_custom_call.1} parent=11 // pred_region
          _
        $region44: #{tpu_custom_call.1} parent=11 // pred_fallthru
          _
        // Predicated region
        $region45: #{tpu_custom_call.1} parent=11 // pred_check
          %p480 = pneg %p268
        $region46: #{tpu_custom_call.1} parent=11 // pred_check_branch
          %482 = sbr.rel (%p480) target = $region48
        $region47: #{tpu_custom_call.1} parent=11 // pred_region
          _
        $region48: #{tpu_custom_call.1} parent=11 // pred_fallthru
          _
        // Predicated region
        $region49: #{tpu_custom_call.1} parent=11 // pred_check
          %p483 = pneg %p289
        $region50: #{tpu_custom_call.1} parent=11 // pred_check_branch
          %485 = sbr.rel (%p483) target = $region52
        $region51: #{tpu_custom_call.1} parent=11 // pred_region
          _
        $region52: #{tpu_custom_call.1} parent=11 // pred_fallthru
          _
        // Predicated region
        $region53: #{tpu_custom_call.1} parent=11 // pred_check
          %p486 = pneg %p310
        $region54: #{tpu_custom_call.1} parent=11 // pred_check_branch
          %488 = sbr.rel (%p486) target = $region56
        $region55: #{tpu_custom_call.1} parent=11 // pred_region
          _
        $region56: #{tpu_custom_call.1} parent=11 // pred_fallthru
          _
        // Predicated region
        $region57: #{tpu_custom_call.1} parent=11 // pred_check
          %p489 = pneg %p331
        $region58: #{tpu_custom_call.1} parent=11 // pred_check_branch
          %491 = sbr.rel (%p489) target = $region60
        $region59: #{tpu_custom_call.1} parent=11 // pred_region
          _
        $region60: #{tpu_custom_call.1} parent=11 // pred_fallthru
          _
        // Predicated region
        $region61: #{tpu_custom_call.1} parent=11 // pred_check
          %p492 = pneg %p352
        $region62: #{tpu_custom_call.1} parent=11 // pred_check_branch
          %494 = sbr.rel (%p492) target = $region64
        $region63: #{tpu_custom_call.1} parent=11 // pred_region
          _
        $region64: #{tpu_custom_call.1} parent=11 // pred_fallthru
          _
        // Predicated region
        $region65: #{tpu_custom_call.1} parent=11 // pred_check
          %p495 = pneg %p373
        $region66: #{tpu_custom_call.1} parent=11 // pred_check_branch
          %497 = sbr.rel (%p495) target = $region68
        $region67: #{tpu_custom_call.1} parent=11 // pred_region
          _
        $region68: #{tpu_custom_call.1} parent=11 // pred_fallthru
          _
        // Predicated region
        $region69: #{tpu_custom_call.1} parent=11 // pred_check
          %p498 = pneg %p394
        $region70: #{tpu_custom_call.1} parent=11 // pred_check_branch
          %500 = sbr.rel (%p498) target = $region72
        $region71: #{tpu_custom_call.1} parent=11 // pred_region
          _
        $region72: #{tpu_custom_call.1} parent=11 // pred_fallthru
          _
        // Predicated region
        $region73: #{tpu_custom_call.1} parent=11 // pred_check
          %p501 = pneg %p415
        $region74: #{tpu_custom_call.1} parent=11 // pred_check_branch
          %503 = sbr.rel (%p501) target = $region76
        $region75: #{tpu_custom_call.1} parent=11 // pred_region
          _
        $region76: #{tpu_custom_call.1} parent=11 // pred_fallthru
          _
      $region12: #{tpu_custom_call.1} parent=5 // pred_fallthru
        _
      %p504 = scmp.lt.s32.totalorder %s27, 2
      // Predicated region
      $region77: #{tpu_custom_call.1} parent=5 // pred_check
        %p505 = pneg %p504
      $region78: #{tpu_custom_call.1} parent=5 // pred_check_branch
        %507 = sbr.rel (%p505) target = $region80
      $region79: #{tpu_custom_call.1} parent=5 // pred_region
        // Predicated region
        $region81: #{tpu_custom_call.1} parent=79 // pred_check
          %p508 = pneg %p47
        $region82: #{tpu_custom_call.1} parent=79 // pred_check_branch
          %510 = sbr.rel (%p508) target = $region84
        $region83: #{tpu_custom_call.1} parent=79 // pred_region
          %s511 = smul.u32 4, %s27
          %p512 = scmp.lt.s32.totalorder %s511, 7
          %s513 = scalar_select %p512, %s511, 7
          %s514 = smul.addr %s513, 8
          %s515 = scalar_lea.vmem %s0, %s514
          %s516 = smul.u32 4, %s27
        $region84: #{tpu_custom_call.1} parent=79 // pred_fallthru
          _
        // Predicated region
        $region85: #{tpu_custom_call.1} parent=79 // pred_check
          %p517 = pneg %p73
        $region86: #{tpu_custom_call.1} parent=79 // pred_check_branch
          %519 = sbr.rel (%p517) target = $region88
        $region87: #{tpu_custom_call.1} parent=79 // pred_region
          %s520 = smul.u32 4, %s27
          %p521 = scmp.lt.s32.totalorder %s520, 7
          %s522 = scalar_select %p521, %s520, 7
          %s523 = smul.addr %s522, 8
          %s524 = scalar_lea.vmem %s1, %s523
          %s525 = smul.u32 4, %s27
        $region88: #{tpu_custom_call.1} parent=79 // pred_fallthru
          _
      $region80: #{tpu_custom_call.1} parent=5 // pred_fallthru
        _
      %p526 = scmp.le.s32.totalorder 1, %s27
      %p527 = scmp.lt.s32.totalorder %s27, 3
      %p528 = pnand %p526, %p527
      %p529 = pneg %p528
      // Predicated region
      $region89: #{tpu_custom_call.1} parent=5 // pred_check
        _
      $region90: #{tpu_custom_call.1} parent=5 // pred_check_branch
        %531 = sbr.rel (%p528) target = $region92
      $region91: #{tpu_custom_call.1} parent=5 // pred_region
        %s532 = ssub.s32 %s27, 1
        %s533 = smul.u32 4, %s32
        %p534 = scmp.lt.s32.totalorder %s533, 7
        %s535 = scalar_select %p534, %s533, 7
        %s536 = smul.addr %s535, 8
        %s537 = scalar_lea.vmem %s0, %s536
        %p538 = pneg %p53
        %p539 = pneg %p50
        %s540 = smul.u32 4, %s32
        %p541 = scmp.lt.s32.totalorder %s540, 7
        %s542 = scalar_select %p541, %s540, 7
        %s543 = smul.addr %s542, 8
        %s544 = scalar_lea.vmem %s1, %s543
        %p545 = pneg %p79
        %p546 = pneg %p76
        %p547 = pneg %p100
        %p548 = pneg %p97
        %p549 = pneg %p121
        %p550 = pneg %p118
        %p551 = pneg %p142
        %p552 = pneg %p139
        %p553 = pneg %p163
        %p554 = pneg %p160
        %p555 = pneg %p184
        %p556 = pneg %p181
        %p557 = pneg %p205
        %p558 = pneg %p202
        %p559 = pneg %p226
        %p560 = pneg %p223
        %p561 = pneg %p247
        %p562 = pneg %p244
        %p563 = pneg %p268
        %p564 = pneg %p265
        %p565 = pneg %p289
        %p566 = pneg %p286
        %p567 = pneg %p310
        %p568 = pneg %p307
        %p569 = pneg %p331
        %p570 = pneg %p328
        %p571 = pneg %p352
        %p572 = pneg %p349
        %p573 = pneg %p373
        %p574 = pneg %p370
        %p575 = pneg %p394
        %p576 = pneg %p391
        %p577 = pneg %p415
        %p578 = pneg %p412
        %p579 = pneg %p441
        %p580 = pneg %p438
        %s581 = sand.u32 %s428, 1
        %s582 = scalar_lea.sflag [#allocation8], %s581
        %s583 = sand.u32 %s428, 1
        %s584 = smul.addr %s583, 32
        %s585 = scalar_lea.vmem [#allocation7], %s584
        %s586 = smul.u32 4, %s32
        %p587 = scmp.lt.s32.totalorder %s586, 7
        %s588 = scalar_select %p587, %s586, 7
        %s589 = smul.addr %s588, 8
        %s590 = scalar_lea.vmem %s0, %s589
        %s591 = smul.u32 4, %s32
        %s592 = smul.u32 4, %s32
        %p593 = scmp.lt.s32.totalorder %s592, 7
        %s594 = scalar_select %p593, %s592, 7
        %s595 = smul.addr %s594, 8
        %s596 = scalar_lea.vmem %s1, %s595
        %s597 = smul.u32 4, %s32
        %s598 = smul.u32 4, %s32
        %v599 = vld [vmem:[%s2] sm:$0xf]
        %v600 = vld [vmem:[%s3] sm:$0x1]
        %v601 = vld [vmem:[%s4] sm:$0xff]
        %v602 = vld [vmem:[%s4 + $0x8] sm:$0xff]
        %v603 = vld [vmem:[%s5] sm:$0x1]
        %v604 = vld [vmem:[%s6] sm:$0xff]
        %v605 = vld [vmem:[%s6 + $0x8] sm:$0xff]
        %v606 = vld [vmem:[%s7] sm:$0x1]
        %v607 = vld [vmem:[%s8] sm:$0xff]
        %v608 = vld [vmem:[%s8 + $0x8] sm:$0xff]
        %v609 = vld [vmem:[%s8 + $0x10] sm:$0xff]
        %v610 = vld [vmem:[%s8 + $0x18] sm:$0xff]
        %v611 = vld [vmem:[%s9] sm:$0xf]
        %v612 = vld [vmem:[%s10] sm:$0x1]
        %v613 = vld [vmem:[%s11] sm:$0xff]
        %v614 = vld [vmem:[%s11 + $0x8] sm:$0xff]
        %v615 = vld [vmem:[%s11 + $0x10] sm:$0xff]
        %v616 = vld [vmem:[%s11 + $0x18] sm:$0xff]
        %v617 = vld [vmem:[%s12] sm:$0x1]
        %v618 = vld [vmem:[%s13] sm:$0xff]
        %v619 = vld [vmem:[%s13 + $0x8] sm:$0xff]
        %v620 = vld [vmem:[%s13 + $0x10] sm:$0xff]
        %v621 = vld [vmem:[%s13 + $0x18] sm:$0xff]
        %v622 = vld [vmem:[%s14] sm:$0x1]
        %v623 = vld [vmem:[%s15] sm:$0xff]
        %v624 = vld [vmem:[%s15 + $0x8] sm:$0xff]
        %v625 = vld [vmem:[%s15 + $0x10] sm:$0xff]
        %v626 = vld [vmem:[%s15 + $0x18] sm:$0xff]
        %v627 = vld [vmem:[%s16] sm:$0x1]
        %v628 = vld [vmem:[%s17] sm:$0xf]
        %p629 = scmp.eq.s32.totalorder %s32, 0
        // Predicated region
        $region93: #{tpu_custom_call.1} parent=91 // pred_check
          %p630 = pneg %p629
        $region94: #{tpu_custom_call.1} parent=91 // pred_check_branch
          %632 = sbr.rel (%p630) target = $region96
        $region95: #{tpu_custom_call.1} parent=91 // pred_region
          %vm633 = vcmask 261120
          %634 = vst.msk [vmem:[#allocation6] sm:$0xff] %vm633, 0.0
        $region96: #{tpu_custom_call.1} parent=91 // pred_fallthru
          _
        %v635 = vld [vmem:[%s590] sm:$0xff]
        %v636 = vld [vmem:[%s590 + $0x8] sm:$0xff]
        %v637 = vld [vmem:[%s590 + $0x10] sm:$0xff]
        %v638 = vld [vmem:[%s590 + $0x18] sm:$0xff]
        %v640 = vlaneseq
        %v641 = vshrl.u32 %v640, 7
        %v642 = vsub.s32 0, %v641
        %v643 = vrot.slane %v600, %v642
        %vm645 = vcmask 31744
        %v647 = vsel %vm645, %v635, 0
        %v650 = vsel %vm645, %v636, 0
        %v653 = vsel %vm645, %v637, 0
        %v656 = vsel %vm645, %v638, 0
        %vm658 = vcmask 1043456
        %v660 = vsel %vm658, %v599, 0
        %662 = vmatprep.subr.mxu0 0.0
        %663 = vmatpush1.msra.mxu0 %v660
        %664 = vmatprep.subr.mxu0 0.0
        %665 = vmatpush1.msra.mxu0 0.0
        %666 = vmatprep.subr.mxu0 0.0
        %667 = vmatpush1.msra.mxu0 0.0
        %668 = vmatprep.subr.mxu0 0.0
        %669 = vmatpush1.msra.mxu0 0.0
        %670 = vmatprep.subr.mxu0 0.0
        %671 = vmatpush1.msra.mxu0 0.0
        %672 = vmatprep.subr.mxu0 0.0
        %673 = vmatpush1.msra.mxu0 0.0
        %674 = vmatprep.subr.mxu0 0.0
        %675 = vmatpush1.msra.mxu0 0.0
        %676 = vmatprep.subr.mxu0 0.0
        %677 = vmatpush1.msra.mxu0 0.0
        %678 = vmatprep.subr.mxu0 0.0
        %679 = vmatpush1.msra.mxu0 0.0
        %680 = vmatprep.subr.mxu0 0.0
        %681 = vmatpush1.msra.mxu0 0.0
        %682 = vmatprep.subr.mxu0 0.0
        %683 = vmatpush1.msra.mxu0 0.0
        %684 = vmatprep.subr.mxu0 0.0
        %685 = vmatpush1.msra.mxu0 0.0
        %686 = vmatprep.subr.mxu0 0.0
        %687 = vmatpush1.msra.mxu0 0.0
        %688 = vmatprep.subr.mxu0 0.0
        %689 = vmatpush1.msra.mxu0 0.0
        %690 = vmatprep.subr.mxu0 0.0
        %691 = vmatpush1.msra.mxu0 0.0
        %692 = vmatprep.subr.mxu0 0.0
        %693 = vmatpush1.msra.mxu0 0.0
        %694 = vmatprep.subr.mxu0 0.0
        %695 = vmatpush1.msra.mxu0 0.0
        %696 = vmatprep.subr.mxu0 0.0
        %697 = vmatpush1.msra.mxu0 0.0
        %698 = vmatprep.subr.mxu0 0.0
        %699 = vmatpush1.msra.mxu0 0.0
        %700 = vmatprep.subr.mxu0 0.0
        %701 = vmatpush1.msra.mxu0 0.0
        %702 = vmatprep.subr.mxu0 0.0
        %703 = vmatpush1.msra.mxu0 0.0
        %704 = vmatprep.subr.mxu0 0.0
        %705 = vmatpush1.msra.mxu0 0.0
        %706 = vmatprep.subr.mxu0 0.0
        %707 = vmatpush1.msra.mxu0 0.0
        %708 = vmatprep.subr.mxu0 0.0
        %709 = vmatpush1.msra.mxu0 0.0
        %710 = vmatprep.subr.mxu0 0.0
        %711 = vmatpush1.msra.mxu0 0.0
        %712 = vmatprep.subr.mxu0 0.0
        %713 = vmatpush1.msra.mxu0 0.0
        %714 = vmatprep.subr.mxu0 0.0
        %715 = vmatpush1.msra.mxu0 0.0
        %716 = vmatprep.subr.mxu0 0.0
        %717 = vmatpush1.msra.mxu0 0.0
        %718 = vmatprep.subr.mxu0 0.0
        %719 = vmatpush1.msra.mxu0 0.0
        %720 = vmatprep.subr.mxu0 0.0
        %721 = vmatpush1.msra.mxu0 0.0
        %722 = vmatprep.subr.mxu0 0.0
        %723 = vmatpush1.msra.mxu0 0.0
        %724 = vmatprep.subr.mxu0 0.0
        %725 = vmatpush1.msra.mxu0 0.0
        %726 = vmatprep.mubr.f32.mxu0 0.0
        %727 = vmatmul.mubr.f32.gmra.mrb[0].mxu0 %v647
        %v728 = vpop.f32.mrb[0].mxu0
        %v729 = vadd.f32 %v643, %v728
        %v730 = vpop.f32.mrb[0].mxu0
        %731 = vmatprep.mubr.f32.mxu0 0.0
        %732 = vmatmul.mubr.f32.gmra.mrb[0].mxu0 %v650
        %v733 = vpop.f32.mrb[0].mxu0
        %v734 = vadd.f32 %v643, %v733
        %v735 = vpop.f32.mrb[0].mxu0
        %736 = vmatprep.mubr.f32.mxu0 0.0
        %737 = vmatmul.mubr.f32.gmra.mrb[0].mxu0 %v653
        %v738 = vpop.f32.mrb[0].mxu0
        %v739 = vadd.f32 %v643, %v738
        %v740 = vpop.f32.mrb[0].mxu0
        %741 = vmatprep.mubr.f32.mxu0 0.0
        %742 = vmatmul.mubr.f32.gmra.mrb[0].mxu0 %v656
        %v743 = vpop.f32.mrb[0].mxu0
        %v744 = vadd.f32 %v643, %v743
        %v745 = vpop.f32.mrb[0].mxu0
        %746 = vdwg.mxu0
        %v747 = vmax.f32 %v729, 0.0
        %v748 = vmax.f32 %v734, 0.0
        %v749 = vmax.f32 %v739, 0.0
        %v750 = vmax.f32 %v744, 0.0
        %v752 = vlaneseq
        %v753 = vshrl.u32 %v752, 7
        %v754 = vsub.s32 0, %v753
        %v755 = vrot.slane %v603, %v754
        %vm757 = vcmask 130048
        %v759 = vsel %vm757, %v747, 0
        %v762 = vsel %vm757, %v748, 0
        %v765 = vsel %vm757, %v749, 0
        %v768 = vsel %vm757, %v750, 0
        %770 = vmatprep.subr.mxu0 0.0
        %771 = vmatpush1.msra.mxu0 %v601
        %772 = vmatprep.subr.mxu0 0.0
        %773 = vmatpush1.msra.mxu0 %v602
        %774 = vmatprep.subr.mxu0 0.0
        %775 = vmatpush1.msra.mxu0 0.0
        %776 = vmatprep.subr.mxu0 0.0
        %777 = vmatpush1.msra.mxu0 0.0
        %778 = vmatprep.subr.mxu0 0.0
        %779 = vmatpush1.msra.mxu0 0.0
        %780 = vmatprep.subr.mxu0 0.0
        %781 = vmatpush1.msra.mxu0 0.0
        %782 = vmatprep.subr.mxu0 0.0
        %783 = vmatpush1.msra.mxu0 0.0
        %784 = vmatprep.subr.mxu0 0.0
        %785 = vmatpush1.msra.mxu0 0.0
        %786 = vmatprep.subr.mxu0 0.0
        %787 = vmatpush1.msra.mxu0 0.0
        %788 = vmatprep.subr.mxu0 0.0
        %789 = vmatpush1.msra.mxu0 0.0
        %790 = vmatprep.subr.mxu0 0.0
        %791 = vmatpush1.msra.mxu0 0.0
        %792 = vmatprep.subr.mxu0 0.0
        %793 = vmatpush1.msra.mxu0 0.0
        %794 = vmatprep.subr.mxu0 0.0
        %795 = vmatpush1.msra.mxu0 0.0
        %796 = vmatprep.subr.mxu0 0.0
        %797 = vmatpush1.msra.mxu0 0.0
        %798 = vmatprep.subr.mxu0 0.0
        %799 = vmatpush1.msra.mxu0 0.0
        %800 = vmatprep.subr.mxu0 0.0
        %801 = vmatpush1.msra.mxu0 0.0
        %802 = vmatprep.subr.mxu0 0.0
        %803 = vmatpush1.msra.mxu0 0.0
        %804 = vmatprep.subr.mxu0 0.0
        %805 = vmatpush1.msra.mxu0 0.0
        %806 = vmatprep.subr.mxu0 0.0
        %807 = vmatpush1.msra.mxu0 0.0
        %808 = vmatprep.subr.mxu0 0.0
        %809 = vmatpush1.msra.mxu0 0.0
        %810 = vmatprep.subr.mxu0 0.0
        %811 = vmatpush1.msra.mxu0 0.0
        %812 = vmatprep.subr.mxu0 0.0
        %813 = vmatpush1.msra.mxu0 0.0
        %814 = vmatprep.subr.mxu0 0.0
        %815 = vmatpush1.msra.mxu0 0.0
        %816 = vmatprep.subr.mxu0 0.0
        %817 = vmatpush1.msra.mxu0 0.0
        %818 = vmatprep.subr.mxu0 0.0
        %819 = vmatpush1.msra.mxu0 0.0
        %820 = vmatprep.subr.mxu0 0.0
        %821 = vmatpush1.msra.mxu0 0.0
        %822 = vmatprep.subr.mxu0 0.0
        %823 = vmatpush1.msra.mxu0 0.0
        %824 = vmatprep.subr.mxu0 0.0
        %825 = vmatpush1.msra.mxu0 0.0
        %826 = vmatprep.subr.mxu0 0.0
        %827 = vmatpush1.msra.mxu0 0.0
        %828 = vmatprep.subr.mxu0 0.0
        %829 = vmatpush1.msra.mxu0 0.0
        %830 = vmatprep.subr.mxu0 0.0
        %831 = vmatpush1.msra.mxu0 0.0
        %832 = vmatprep.subr.mxu0 0.0
        %833 = vmatpush1.msra.mxu0 0.0
        %834 = vmatprep.mubr.f32.mxu0 0.0
        %835 = vmatmul.mubr.f32.gmra.mrb[0].mxu0 %v759
        %v836 = vpop.f32.mrb[0].mxu0
        %v837 = vadd.f32 %v755, %v836
        %v838 = vpop.f32.mrb[0].mxu0
        %839 = vmatprep.mubr.f32.mxu0 0.0
        %840 = vmatmul.mubr.f32.gmra.mrb[0].mxu0 %v762
        %v841 = vpop.f32.mrb[0].mxu0
        %v842 = vadd.f32 %v755, %v841
        %v843 = vpop.f32.mrb[0].mxu0
        %844 = vmatprep.mubr.f32.mxu0 0.0
        %845 = vmatmul.mubr.f32.gmra.mrb[0].mxu0 %v765
        %v846 = vpop.f32.mrb[0].mxu0
        %v847 = vadd.f32 %v755, %v846
        %v848 = vpop.f32.mrb[0].mxu0
        %849 = vmatprep.mubr.f32.mxu0 0.0
        %850 = vmatmul.mubr.f32.gmra.mrb[0].mxu0 %v768
        %v851 = vpop.f32.mrb[0].mxu0
        %v852 = vadd.f32 %v755, %v851
        %v853 = vpop.f32.mrb[0].mxu0
        %854 = vdwg.mxu0
        %v856 = vlaneseq
        %v857 = vshrl.u32 %v856, 7
        %v858 = vsub.s32 0, %v857
        %v859 = vrot.slane %v606, %v858
        %v862 = vsel %vm757, %v837, 0
        %v865 = vsel %vm757, %v842, 0
        %v868 = vsel %vm757, %v847, 0
        %v871 = vsel %vm757, %v852, 0
        %873 = vmatprep.subr.mxu0 0.0
        %874 = vmatpush1.msra.mxu0 %v604
        %875 = vmatprep.subr.mxu0 0.0
        %876 = vmatpush1.msra.mxu0 %v605
        %877 = vmatprep.subr.mxu0 0.0
        %878 = vmatpush1.msra.mxu0 0.0
        %879 = vmatprep.subr.mxu0 0.0
        %880 = vmatpush1.msra.mxu0 0.0
        %881 = vmatprep.subr.mxu0 0.0
        %882 = vmatpush1.msra.mxu0 0.0
        %883 = vmatprep.subr.mxu0 0.0
        %884 = vmatpush1.msra.mxu0 0.0
        %885 = vmatprep.subr.mxu0 0.0
        %886 = vmatpush1.msra.mxu0 0.0
        %887 = vmatprep.subr.mxu0 0.0
        %888 = vmatpush1.msra.mxu0 0.0
        %889 = vmatprep.subr.mxu0 0.0
        %890 = vmatpush1.msra.mxu0 0.0
        %891 = vmatprep.subr.mxu0 0.0
        %892 = vmatpush1.msra.mxu0 0.0
        %893 = vmatprep.subr.mxu0 0.0
        %894 = vmatpush1.msra.mxu0 0.0
        %895 = vmatprep.subr.mxu0 0.0
        %896 = vmatpush1.msra.mxu0 0.0
        %897 = vmatprep.subr.mxu0 0.0
        %898 = vmatpush1.msra.mxu0 0.0
        %899 = vmatprep.subr.mxu0 0.0
        %900 = vmatpush1.msra.mxu0 0.0
        %901 = vmatprep.subr.mxu0 0.0
        %902 = vmatpush1.msra.mxu0 0.0
        %903 = vmatprep.subr.mxu0 0.0
        %904 = vmatpush1.msra.mxu0 0.0
        %905 = vmatprep.subr.mxu0 0.0
        %906 = vmatpush1.msra.mxu0 0.0
        %907 = vmatprep.subr.mxu0 0.0
        %908 = vmatpush1.msra.mxu0 0.0
        %909 = vmatprep.subr.mxu0 0.0
        %910 = vmatpush1.msra.mxu0 0.0
        %911 = vmatprep.subr.mxu0 0.0
        %912 = vmatpush1.msra.mxu0 0.0
        %913 = vmatprep.subr.mxu0 0.0
        %914 = vmatpush1.msra.mxu0 0.0
        %915 = vmatprep.subr.mxu0 0.0
        %916 = vmatpush1.msra.mxu0 0.0
        %917 = vmatprep.subr.mxu0 0.0
        %918 = vmatpush1.msra.mxu0 0.0
        %919 = vmatprep.subr.mxu0 0.0
        %920 = vmatpush1.msra.mxu0 0.0
        %921 = vmatprep.subr.mxu0 0.0
        %922 = vmatpush1.msra.mxu0 0.0
        %923 = vmatprep.subr.mxu0 0.0
        %924 = vmatpush1.msra.mxu0 0.0
        %925 = vmatprep.subr.mxu0 0.0
        %926 = vmatpush1.msra.mxu0 0.0
        %927 = vmatprep.subr.mxu0 0.0
        %928 = vmatpush1.msra.mxu0 0.0
        %929 = vmatprep.subr.mxu0 0.0
        %930 = vmatpush1.msra.mxu0 0.0
        %931 = vmatprep.subr.mxu0 0.0
        %932 = vmatpush1.msra.mxu0 0.0
        %933 = vmatprep.subr.mxu0 0.0
        %934 = vmatpush1.msra.mxu0 0.0
        %935 = vmatprep.subr.mxu0 0.0
        %936 = vmatpush1.msra.mxu0 0.0
        %937 = vmatprep.mubr.f32.mxu0 0.0
        %938 = vmatmul.mubr.f32.gmra.mrb[0].mxu0 %v862
        %v939 = vpop.f32.mrb[0].mxu0
        %v940 = vadd.f32 %v859, %v939
        %v941 = vpop.f32.mrb[0].mxu0
        %942 = vmatprep.mubr.f32.mxu0 0.0
        %943 = vmatmul.mubr.f32.gmra.mrb[0].mxu0 %v865
        %v944 = vpop.f32.mrb[0].mxu0
        %v945 = vadd.f32 %v859, %v944
        %v946 = vpop.f32.mrb[0].mxu0
        %947 = vmatprep.mubr.f32.mxu0 0.0
        %948 = vmatmul.mubr.f32.gmra.mrb[0].mxu0 %v868
        %v949 = vpop.f32.mrb[0].mxu0
        %v950 = vadd.f32 %v859, %v949
        %v951 = vpop.f32.mrb[0].mxu0
        %952 = vmatprep.mubr.f32.mxu0 0.0
        %953 = vmatmul.mubr.f32.gmra.mrb[0].mxu0 %v871
        %v954 = vpop.f32.mrb[0].mxu0
        %v955 = vadd.f32 %v859, %v954
        %v956 = vpop.f32.mrb[0].mxu0
        %957 = vdwg.mxu0
        %958 = vst [vmem:[#allocation2] sm:$0xff] %v940
        %959 = vst [vmem:[#allocation2 + $0x8] sm:$0xff] %v945
        %960 = vst [vmem:[#allocation2 + $0x10] sm:$0xff] %v950
        %961 = vst [vmem:[#allocation2 + $0x18] sm:$0xff] %v955
        %v962 = vld [vmem:[%s596] sm:$0xff]
        %v963 = vld [vmem:[%s596 + $0x8] sm:$0xff]
        %v964 = vld [vmem:[%s596 + $0x10] sm:$0xff]
        %v965 = vld [vmem:[%s596 + $0x18] sm:$0xff]
        %v967 = vlaneseq
        %v968 = vshrl.u32 %v967, 7
        %v969 = vsub.s32 0, %v968
        %v970 = vrot.slane %v612, %v969
        %v973 = vsel %vm645, %v962, 0
        %v976 = vsel %vm645, %v963, 0
        %v979 = vsel %vm645, %v964, 0
        %v982 = vsel %vm645, %v965, 0
        %v985 = vsel %vm658, %v611, 0
        %987 = vmatprep.subr.mxu0 0.0
        %988 = vmatpush1.msra.mxu0 %v985
        %989 = vmatprep.subr.mxu0 0.0
        %990 = vmatpush1.msra.mxu0 0.0
        %991 = vmatprep.subr.mxu0 0.0
        %992 = vmatpush1.msra.mxu0 0.0
        %993 = vmatprep.subr.mxu0 0.0
        %994 = vmatpush1.msra.mxu0 0.0
        %995 = vmatprep.subr.mxu0 0.0
        %996 = vmatpush1.msra.mxu0 0.0
        %997 = vmatprep.subr.mxu0 0.0
        %998 = vmatpush1.msra.mxu0 0.0
        %999 = vmatprep.subr.mxu0 0.0
        %1000 = vmatpush1.msra.mxu0 0.0
        %1001 = vmatprep.subr.mxu0 0.0
        %1002 = vmatpush1.msra.mxu0 0.0
        %1003 = vmatprep.subr.mxu0 0.0
        %1004 = vmatpush1.msra.mxu0 0.0
        %1005 = vmatprep.subr.mxu0 0.0
        %1006 = vmatpush1.msra.mxu0 0.0
        %1007 = vmatprep.subr.mxu0 0.0
        %1008 = vmatpush1.msra.mxu0 0.0
        %1009 = vmatprep.subr.mxu0 0.0
        %1010 = vmatpush1.msra.mxu0 0.0
        %1011 = vmatprep.subr.mxu0 0.0
        %1012 = vmatpush1.msra.mxu0 0.0
        %1013 = vmatprep.subr.mxu0 0.0
        %1014 = vmatpush1.msra.mxu0 0.0
        %1015 = vmatprep.subr.mxu0 0.0
        %1016 = vmatpush1.msra.mxu0 0.0
        %1017 = vmatprep.subr.mxu0 0.0
        %1018 = vmatpush1.msra.mxu0 0.0
        %1019 = vmatprep.subr.mxu0 0.0
        %1020 = vmatpush1.msra.mxu0 0.0
        %1021 = vmatprep.subr.mxu0 0.0
        %1022 = vmatpush1.msra.mxu0 0.0
        %1023 = vmatprep.subr.mxu0 0.0
        %1024 = vmatpush1.msra.mxu0 0.0
        %1025 = vmatprep.subr.mxu0 0.0
        %1026 = vmatpush1.msra.mxu0 0.0
        %1027 = vmatprep.subr.mxu0 0.0
        %1028 = vmatpush1.msra.mxu0 0.0
        %1029 = vmatprep.subr.mxu0 0.0
        %1030 = vmatpush1.msra.mxu0 0.0
        %1031 = vmatprep.subr.mxu0 0.0
        %1032 = vmatpush1.msra.mxu0 0.0
        %1033 = vmatprep.subr.mxu0 0.0
        %1034 = vmatpush1.msra.mxu0 0.0
        %1035 = vmatprep.subr.mxu0 0.0
        %1036 = vmatpush1.msra.mxu0 0.0
        %1037 = vmatprep.subr.mxu0 0.0
        %1038 = vmatpush1.msra.mxu0 0.0
        %1039 = vmatprep.subr.mxu0 0.0
        %1040 = vmatpush1.msra.mxu0 0.0
        %1041 = vmatprep.subr.mxu0 0.0
        %1042 = vmatpush1.msra.mxu0 0.0
        %1043 = vmatprep.subr.mxu0 0.0
        %1044 = vmatpush1.msra.mxu0 0.0
        %1045 = vmatprep.subr.mxu0 0.0
        %1046 = vmatpush1.msra.mxu0 0.0
        %1047 = vmatprep.subr.mxu0 0.0
        %1048 = vmatpush1.msra.mxu0 0.0
        %1049 = vmatprep.subr.mxu0 0.0
        %1050 = vmatpush1.msra.mxu0 0.0
        %1051 = vmatprep.mubr.f32.mxu0 0.0
        %1052 = vmatmul.mubr.f32.gmra.mrb[0].mxu0 %v973
        %v1053 = vpop.f32.mrb[0].mxu0
        %v1054 = vadd.f32 %v970, %v1053
        %v1055 = vpop.f32.mrb[0].mxu0
        %1056 = vmatprep.mubr.f32.mxu0 0.0
        %1057 = vmatmul.mubr.f32.gmra.mrb[0].mxu0 %v976
        %v1058 = vpop.f32.mrb[0].mxu0
        %v1059 = vadd.f32 %v970, %v1058
        %v1060 = vpop.f32.mrb[0].mxu0
        %1061 = vmatprep.mubr.f32.mxu0 0.0
        %1062 = vmatmul.mubr.f32.gmra.mrb[0].mxu0 %v979
        %v1063 = vpop.f32.mrb[0].mxu0
        %v1064 = vadd.f32 %v970, %v1063
        %v1065 = vpop.f32.mrb[0].mxu0
        %1066 = vmatprep.mubr.f32.mxu0 0.0
        %1067 = vmatmul.mubr.f32.gmra.mrb[0].mxu0 %v982
        %v1068 = vpop.f32.mrb[0].mxu0
        %v1069 = vadd.f32 %v970, %v1068
        %v1070 = vpop.f32.mrb[0].mxu0
        %1071 = vdwg.mxu0
        %v1072 = vmax.f32 %v1054, 0.0
        %v1073 = vmax.f32 %v1059, 0.0
        %v1074 = vmax.f32 %v1064, 0.0
        %v1075 = vmax.f32 %v1069, 0.0
        %v1077 = vlaneseq
        %v1078 = vshrl.u32 %v1077, 7
        %v1079 = vsub.s32 0, %v1078
        %v1080 = vrot.slane %v617, %v1079
        %vm1082 = vcmask 261120
        %v1084 = vsel %vm1082, %v1072, 0
        %v1087 = vsel %vm1082, %v1073, 0
        %v1090 = vsel %vm1082, %v1074, 0
        %v1093 = vsel %vm1082, %v1075, 0
        %1095 = vmatprep.subr.mxu0 0.0
        %1096 = vmatpush1.msra.mxu0 %v613
        %1097 = vmatprep.subr.mxu0 0.0
        %1098 = vmatpush1.msra.mxu0 %v614
        %1099 = vmatprep.subr.mxu0 0.0
        %1100 = vmatpush1.msra.mxu0 %v615
        %1101 = vmatprep.subr.mxu0 0.0
        %1102 = vmatpush1.msra.mxu0 %v616
        %1103 = vmatprep.subr.mxu0 0.0
        %1104 = vmatpush1.msra.mxu0 0.0
        %1105 = vmatprep.subr.mxu0 0.0
        %1106 = vmatpush1.msra.mxu0 0.0
        %1107 = vmatprep.subr.mxu0 0.0
        %1108 = vmatpush1.msra.mxu0 0.0
        %1109 = vmatprep.subr.mxu0 0.0
        %1110 = vmatpush1.msra.mxu0 0.0
        %1111 = vmatprep.subr.mxu0 0.0
        %1112 = vmatpush1.msra.mxu0 0.0
        %1113 = vmatprep.subr.mxu0 0.0
        %1114 = vmatpush1.msra.mxu0 0.0
        %1115 = vmatprep.subr.mxu0 0.0
        %1116 = vmatpush1.msra.mxu0 0.0
        %1117 = vmatprep.subr.mxu0 0.0
        %1118 = vmatpush1.msra.mxu0 0.0
        %1119 = vmatprep.subr.mxu0 0.0
        %1120 = vmatpush1.msra.mxu0 0.0
        %1121 = vmatprep.subr.mxu0 0.0
        %1122 = vmatpush1.msra.mxu0 0.0
        %1123 = vmatprep.subr.mxu0 0.0
        %1124 = vmatpush1.msra.mxu0 0.0
        %1125 = vmatprep.subr.mxu0 0.0
        %1126 = vmatpush1.msra.mxu0 0.0
        %1127 = vmatprep.subr.mxu0 0.0
        %1128 = vmatpush1.msra.mxu0 0.0
        %1129 = vmatprep.subr.mxu0 0.0
        %1130 = vmatpush1.msra.mxu0 0.0
        %1131 = vmatprep.subr.mxu0 0.0
        %1132 = vmatpush1.msra.mxu0 0.0
        %1133 = vmatprep.subr.mxu0 0.0
        %1134 = vmatpush1.msra.mxu0 0.0
        %1135 = vmatprep.subr.mxu0 0.0
        %1136 = vmatpush1.msra.mxu0 0.0
        %1137 = vmatprep.subr.mxu0 0.0
        %1138 = vmatpush1.msra.mxu0 0.0
        %1139 = vmatprep.subr.mxu0 0.0
        %1140 = vmatpush1.msra.mxu0 0.0
        %1141 = vmatprep.subr.mxu0 0.0
        %1142 = vmatpush1.msra.mxu0 0.0
        %1143 = vmatprep.subr.mxu0 0.0
        %1144 = vmatpush1.msra.mxu0 0.0
        %1145 = vmatprep.subr.mxu0 0.0
        %1146 = vmatpush1.msra.mxu0 0.0
        %1147 = vmatprep.subr.mxu0 0.0
        %1148 = vmatpush1.msra.mxu0 0.0
        %1149 = vmatprep.subr.mxu0 0.0
        %1150 = vmatpush1.msra.mxu0 0.0
        %1151 = vmatprep.subr.mxu0 0.0
        %1152 = vmatpush1.msra.mxu0 0.0
        %1153 = vmatprep.subr.mxu0 0.0
        %1154 = vmatpush1.msra.mxu0 0.0
        %1155 = vmatprep.subr.mxu0 0.0
        %1156 = vmatpush1.msra.mxu0 0.0
        %1157 = vmatprep.subr.mxu0 0.0
        %1158 = vmatpush1.msra.mxu0 0.0
        %1159 = vmatprep.mubr.f32.mxu0 0.0
        %1160 = vmatmul.mubr.f32.gmra.mrb[0].mxu0 %v1084
        %v1161 = vpop.f32.mrb[0].mxu0
        %v1162 = vadd.f32 %v1080, %v1161
        %v1163 = vpop.f32.mrb[0].mxu0
        %1164 = vmatprep.mubr.f32.mxu0 0.0
        %1165 = vmatmul.mubr.f32.gmra.mrb[0].mxu0 %v1087
        %v1166 = vpop.f32.mrb[0].mxu0
        %v1167 = vadd.f32 %v1080, %v1166
        %v1168 = vpop.f32.mrb[0].mxu0
        %1169 = vmatprep.mubr.f32.mxu0 0.0
        %1170 = vmatmul.mubr.f32.gmra.mrb[0].mxu0 %v1090
        %v1171 = vpop.f32.mrb[0].mxu0
        %v1172 = vadd.f32 %v1080, %v1171
        %v1173 = vpop.f32.mrb[0].mxu0
        %1174 = vmatprep.mubr.f32.mxu0 0.0
        %1175 = vmatmul.mubr.f32.gmra.mrb[0].mxu0 %v1093
        %v1176 = vpop.f32.mrb[0].mxu0
        %v1177 = vadd.f32 %v1080, %v1176
        %v1178 = vpop.f32.mrb[0].mxu0
        %1179 = vdwg.mxu0
        %v1180 = vlaneseq
        %v1181 = vshrl.u32 %v1180, 7
        %v1182 = vadd.s32 %v1181, 8
        %v1183 = vadd.s32 %v1181, 16
        %v1184 = vadd.s32 %v1181, 24
        %vm1185 = vcmp.lt.s32.totalorder %v1181, 0
        %v1186 = vsub.s32 0, %v1181
        %v1187 = vsel %vm1185, %v1186, %v1181
        %v1188 = vshrl.u32 %v1187, 3
        %v1189 = vand.u32 %v1187, 7
        %v1190 = vsub.s32 0, %v1189
        %v1191 = vsel %vm1185, %v1190, %v1189
        %vm1192 = vcmp.lt.s32.totalorder %v1182, 0
        %v1193 = vsub.s32 0, %v1182
        %v1194 = vsel %vm1192, %v1193, %v1182
        %v1195 = vshrl.u32 %v1194, 3
        %v1196 = vand.u32 %v1194, 7
        %v1197 = vsub.s32 0, %v1196
        %v1198 = vsel %vm1192, %v1197, %v1196
        %vm1199 = vcmp.lt.s32.totalorder %v1183, 0
        %v1200 = vsub.s32 0, %v1183
        %v1201 = vsel %vm1199, %v1200, %v1183
        %v1202 = vshrl.u32 %v1201, 3
        %v1203 = vand.u32 %v1201, 7
        %v1204 = vsub.s32 0, %v1203
        %v1205 = vsel %vm1199, %v1204, %v1203
        %vm1206 = vcmp.lt.s32.totalorder %v1184, 0
        %v1207 = vsub.s32 0, %v1184
        %v1208 = vsel %vm1206, %v1207, %v1184
        %v1209 = vshrl.u32 %v1208, 3
        %v1210 = vand.u32 %v1208, 7
        %v1211 = vsub.s32 0, %v1210
        %v1212 = vsel %vm1206, %v1211, %v1210
        %vm1213 = vcmp.ne.s32.totalorder %v1191, 0
        %vm1214 = vcmp.ne.s32.totalorder %v1198, 0
        %vm1215 = vcmp.ne.s32.totalorder %v1205, 0
        %vm1216 = vcmp.ne.s32.totalorder %v1212, 0
        %vm1217 = vcmp.lt.s32.totalorder %v1191, 0
        %vm1218 = vcmp.lt.s32.totalorder %v1198, 0
        %vm1219 = vcmp.lt.s32.totalorder %v1205, 0
        %vm1220 = vcmp.lt.s32.totalorder %v1212, 0
        %vm1221 = vmand %vm1217, %vm1213
        %vm1222 = vmand %vm1218, %vm1214
        %vm1223 = vmand %vm1219, %vm1215
        %vm1224 = vmand %vm1220, %vm1216
        %v1225 = vadd.s32 %v1191, 8
        %v1226 = vadd.s32 %v1198, 8
        %v1227 = vadd.s32 %v1205, 8
        %v1228 = vadd.s32 %v1212, 8
        %v1229 = vsel %vm1221, %v1225, %v1191
        %v1230 = vsel %vm1222, %v1226, %v1198
        %v1231 = vsel %vm1223, %v1227, %v1205
        %v1232 = vsel %vm1224, %v1228, %v1212
        %vm1233 = vcmp.lt.s32.totalorder %v1229, 2
        %vm1234 = vcmp.lt.s32.totalorder %v1230, 2
        %vm1235 = vcmp.lt.s32.totalorder %v1231, 2
        %vm1236 = vcmp.lt.s32.totalorder %v1232, 2
        %v1237 = vsel %vm1233, %v1162, -1e+30
        %v1238 = vsel %vm1234, %v1167, -1e+30
        %v1239 = vsel %vm1235, %v1172, -1e+30
        %v1240 = vsel %vm1236, %v1177, -1e+30
        %1241 = vst.msk [vmem:[#allocation4] sm:$0xff] %vm645, %v1237
        %1242 = vst.msk [vmem:[#allocation4 + $0x8] sm:$0xff] %vm645, %v1238
        %1243 = vst.msk [vmem:[#allocation4 + $0x10] sm:$0xff] %vm645, %v1239
        %1244 = vst.msk [vmem:[#allocation4 + $0x18] sm:$0xff] %vm645, %v1240
        loop: start=0, step=1, limit=4
        $region97: #{tpu_custom_call.1} parent=91 // loop_pre_header
          _
        $region98: #{tpu_custom_call.1} parent=91 // loop_header
          %s1246 = sphi 0, %s1250
          %p1247 = scmp.ge.s32.totalorder %s1246, 4
        $region99: #{tpu_custom_call.1} parent=91 // loop_header_branch
          %1249 = sbr.rel (%p1247) target = $region103
        $region100: #{tpu_custom_call.1} parent=91 // loop_body
          %s1251 = smul.u32 %s1246, 8
          %s1252 = scalar_lea.vmem [#allocation4], %s1251
          %v1253 = vld [vmem:[%s1252] sm:$0xff]
          %v1254 = vsel %vm645, %v1253, -inf
          %v1255 = vrot.slane %v1254, 4
          %v1256 = vmax.f32 %v1254, %v1255
          %v1257 = vrot.slane %v1256, 2
          %v1258 = vmax.f32 %v1256, %v1257
          %v1259 = vrot.slane %v1258, 1
          %v1260 = vmax.f32 %v1258, %v1259
          %v1261 = vsub.f32 %v1253, %v1260
          %v1262 = vmul.f32 %v1261, 1.442695
          %v1263 = vpow.pop %v1262
          %v1264 = vsel %vm645, %v1263, 0.0
          %v1265 = vrot.slane %v1264, 4
          %v1266 = vadd.f32 %v1264, %v1265
          %v1267 = vrot.slane %v1266, 2
          %v1268 = vadd.f32 %v1266, %v1267
          %v1269 = vrot.slane %v1268, 1
          %v1270 = vadd.f32 %v1268, %v1269
          %v1271 = vrcp.pop %v1270
          %v1272 = vmul.f32 %v1263, %v1271
          %1273 = vst.msk [vmem:[%s1252] sm:$0xff] %vm645, %v1272
        $region101: #{tpu_custom_call.1} parent=91 // loop_footer
          %s1250 = sadd.s32 1, %s1246
        $region102: #{tpu_custom_call.1} parent=91 // loop_footer_branch
          %1245 = sbr.rel target = $region98
        $region103: #{tpu_custom_call.1} parent=91 // loop_exit
          _
        %v1274 = vld [vmem:[#allocation4] sm:$0xff]
        %v1275 = vld [vmem:[#allocation4 + $0x8] sm:$0xff]
        %v1276 = vld [vmem:[#allocation4 + $0x10] sm:$0xff]
        %v1277 = vld [vmem:[#allocation4 + $0x18] sm:$0xff]
        %v1279 = vsel %vm645, %v1274, 0
        %v1282 = vsel %vm645, %v1275, 0
        %v1285 = vsel %vm645, %v1276, 0
        %v1288 = vsel %vm645, %v1277, 0
        %v1291 = vsel %vm658, %v628, 0
        %1293 = vmatprep.subr.mxu0 0.0
        %1294 = vmatpush1.msra.mxu0 %v1291
        %1295 = vmatprep.subr.mxu0 0.0
        %1296 = vmatpush1.msra.mxu0 0.0
        %1297 = vmatprep.subr.mxu0 0.0
        %1298 = vmatpush1.msra.mxu0 0.0
        %1299 = vmatprep.subr.mxu0 0.0
        %1300 = vmatpush1.msra.mxu0 0.0
        %1301 = vmatprep.subr.mxu0 0.0
        %1302 = vmatpush1.msra.mxu0 0.0
        %1303 = vmatprep.subr.mxu0 0.0
        %1304 = vmatpush1.msra.mxu0 0.0
        %1305 = vmatprep.subr.mxu0 0.0
        %1306 = vmatpush1.msra.mxu0 0.0
        %1307 = vmatprep.subr.mxu0 0.0
        %1308 = vmatpush1.msra.mxu0 0.0
        %1309 = vmatprep.subr.mxu0 0.0
        %1310 = vmatpush1.msra.mxu0 0.0
        %1311 = vmatprep.subr.mxu0 0.0
        %1312 = vmatpush1.msra.mxu0 0.0
        %1313 = vmatprep.subr.mxu0 0.0
        %1314 = vmatpush1.msra.mxu0 0.0
        %1315 = vmatprep.subr.mxu0 0.0
        %1316 = vmatpush1.msra.mxu0 0.0
        %1317 = vmatprep.subr.mxu0 0.0
        %1318 = vmatpush1.msra.mxu0 0.0
        %1319 = vmatprep.subr.mxu0 0.0
        %1320 = vmatpush1.msra.mxu0 0.0
        %1321 = vmatprep.subr.mxu0 0.0
        %1322 = vmatpush1.msra.mxu0 0.0
        %1323 = vmatprep.subr.mxu0 0.0
        %1324 = vmatpush1.msra.mxu0 0.0
        %1325 = vmatprep.subr.mxu0 0.0
        %1326 = vmatpush1.msra.mxu0 0.0
        %1327 = vmatprep.subr.mxu0 0.0
        %1328 = vmatpush1.msra.mxu0 0.0
        %1329 = vmatprep.subr.mxu0 0.0
        %1330 = vmatpush1.msra.mxu0 0.0
        %1331 = vmatprep.subr.mxu0 0.0
        %1332 = vmatpush1.msra.mxu0 0.0
        %1333 = vmatprep.subr.mxu0 0.0
        %1334 = vmatpush1.msra.mxu0 0.0
        %1335 = vmatprep.subr.mxu0 0.0
        %1336 = vmatpush1.msra.mxu0 0.0
        %1337 = vmatprep.subr.mxu0 0.0
        %1338 = vmatpush1.msra.mxu0 0.0
        %1339 = vmatprep.subr.mxu0 0.0
        %1340 = vmatpush1.msra.mxu0 0.0
        %1341 = vmatprep.subr.mxu0 0.0
        %1342 = vmatpush1.msra.mxu0 0.0
        %1343 = vmatprep.subr.mxu0 0.0
        %1344 = vmatpush1.msra.mxu0 0.0
        %1345 = vmatprep.subr.mxu0 0.0
        %1346 = vmatpush1.msra.mxu0 0.0
        %1347 = vmatprep.subr.mxu0 0.0
        %1348 = vmatpush1.msra.mxu0 0.0
        %1349 = vmatprep.subr.mxu0 0.0
        %1350 = vmatpush1.msra.mxu0 0.0
        %1351 = vmatprep.subr.mxu0 0.0
        %1352 = vmatpush1.msra.mxu0 0.0
        %1353 = vmatprep.subr.mxu0 0.0
        %1354 = vmatpush1.msra.mxu0 0.0
        %1355 = vmatprep.subr.mxu0 0.0
        %1356 = vmatpush1.msra.mxu0 0.0
        %1357 = vmatprep.mubr.f32.mxu0 0.0
        %1358 = vmatmul.mubr.f32.gmra.mrb[0].mxu0 %v1279
        %v1359 = vpop.f32.mrb[0].mxu0
        %v1360 = vadd.f32 0.0, %v1359
        %v1361 = vpop.f32.mrb[0].mxu0
        %1362 = vmatprep.mubr.f32.mxu0 0.0
        %1363 = vmatmul.mubr.f32.gmra.mrb[0].mxu0 %v1282
        %v1364 = vpop.f32.mrb[0].mxu0
        %v1365 = vadd.f32 0.0, %v1364
        %v1366 = vpop.f32.mrb[0].mxu0
        %1367 = vmatprep.mubr.f32.mxu0 0.0
        %1368 = vmatmul.mubr.f32.gmra.mrb[0].mxu0 %v1285
        %v1369 = vpop.f32.mrb[0].mxu0
        %v1370 = vadd.f32 0.0, %v1369
        %v1371 = vpop.f32.mrb[0].mxu0
        %1372 = vmatprep.mubr.f32.mxu0 0.0
        %1373 = vmatmul.mubr.f32.gmra.mrb[0].mxu0 %v1288
        %v1374 = vpop.f32.mrb[0].mxu0
        %v1375 = vadd.f32 0.0, %v1374
        %v1376 = vpop.f32.mrb[0].mxu0
        %1377 = vdwg.mxu0
        %1378 = vst [vmem:[#allocation3] sm:$0xff] %v1360
        %1379 = vst [vmem:[#allocation3 + $0x8] sm:$0xff] %v1365
        %1380 = vst [vmem:[#allocation3 + $0x10] sm:$0xff] %v1370
        %1381 = vst [vmem:[#allocation3 + $0x18] sm:$0xff] %v1375
        %v1382 = vld [vmem:[#allocation6] sm:$0xff]
        %v1383 = vld [vmem:[#allocation2] sm:$0xff]
        %v1385 = vsel %vm1082, %v1382, 0
        %1387 = vmatprep.subr.mxu0 0.0
        %1388 = vmatpush1.msra.mxu0 %v607
        %1389 = vmatprep.subr.mxu0 0.0
        %1390 = vmatpush1.msra.mxu0 %v608
        %1391 = vmatprep.subr.mxu0 0.0
        %1392 = vmatpush1.msra.mxu0 %v609
        %1393 = vmatprep.subr.mxu0 0.0
        %1394 = vmatpush1.msra.mxu0 %v610
        %1395 = vmatprep.subr.mxu0 0.0
        %1396 = vmatpush1.msra.mxu0 0.0
        %1397 = vmatprep.subr.mxu0 0.0
        %1398 = vmatpush1.msra.mxu0 0.0
        %1399 = vmatprep.subr.mxu0 0.0
        %1400 = vmatpush1.msra.mxu0 0.0
        %1401 = vmatprep.subr.mxu0 0.0
        %1402 = vmatpush1.msra.mxu0 0.0
        %1403 = vmatprep.subr.mxu0 0.0
        %1404 = vmatpush1.msra.mxu0 0.0
        %1405 = vmatprep.subr.mxu0 0.0
        %1406 = vmatpush1.msra.mxu0 0.0
        %1407 = vmatprep.subr.mxu0 0.0
        %1408 = vmatpush1.msra.mxu0 0.0
        %1409 = vmatprep.subr.mxu0 0.0
        %1410 = vmatpush1.msra.mxu0 0.0
        %1411 = vmatprep.subr.mxu0 0.0
        %1412 = vmatpush1.msra.mxu0 0.0
        %1413 = vmatprep.subr.mxu0 0.0
        %1414 = vmatpush1.msra.mxu0 0.0
        %1415 = vmatprep.subr.mxu0 0.0
        %1416 = vmatpush1.msra.mxu0 0.0
        %1417 = vmatprep.subr.mxu0 0.0
        %1418 = vmatpush1.msra.mxu0 0.0
        %1419 = vmatprep.subr.mxu0 0.0
        %1420 = vmatpush1.msra.mxu0 0.0
        %1421 = vmatprep.subr.mxu0 0.0
        %1422 = vmatpush1.msra.mxu0 0.0
        %1423 = vmatprep.subr.mxu0 0.0
        %1424 = vmatpush1.msra.mxu0 0.0
        %1425 = vmatprep.subr.mxu0 0.0
        %1426 = vmatpush1.msra.mxu0 0.0
        %1427 = vmatprep.subr.mxu0 0.0
        %1428 = vmatpush1.msra.mxu0 0.0
        %1429 = vmatprep.subr.mxu0 0.0
        %1430 = vmatpush1.msra.mxu0 0.0
        %1431 = vmatprep.subr.mxu0 0.0
        %1432 = vmatpush1.msra.mxu0 0.0
        %1433 = vmatprep.subr.mxu0 0.0
        %1434 = vmatpush1.msra.mxu0 0.0
        %1435 = vmatprep.subr.mxu0 0.0
        %1436 = vmatpush1.msra.mxu0 0.0
        %1437 = vmatprep.subr.mxu0 0.0
        %1438 = vmatpush1.msra.mxu0 0.0
        %1439 = vmatprep.subr.mxu0 0.0
        %1440 = vmatpush1.msra.mxu0 0.0
        %1441 = vmatprep.subr.mxu0 0.0
        %1442 = vmatpush1.msra.mxu0 0.0
        %1443 = vmatprep.subr.mxu0 0.0
        %1444 = vmatpush1.msra.mxu0 0.0
        %1445 = vmatprep.subr.mxu0 0.0
        %1446 = vmatpush1.msra.mxu0 0.0
        %1447 = vmatprep.subr.mxu0 0.0
        %1448 = vmatpush1.msra.mxu0 0.0
        %1449 = vmatprep.subr.mxu0 0.0
        %1450 = vmatpush1.msra.mxu0 0.0
        %1451 = vmatprep.mubr.f32.mxu0 0.0
        %1452 = vmatmul.mubr.f32.gmra.mrb[0].mxu0 %v1385
        %v1453 = vpop.f32.mrb[0].mxu0
        %v1454 = vadd.f32 0.0, %v1453
        %v1455 = vpop.f32.mrb[0].mxu0
        %1456 = vdwg.mxu0
        %v1457 = vadd.f32 %v1383, %v1454
        %v1458 = vtanh.pop %v1457
        %v1459 = vld [vmem:[#allocation3] sm:$0xff]
        %v1460 = vmul.f32 %v1458, %v1459
        %1462 = vrot.lane.b32.xlu0 %v1460, 96
        %v1463 = vpop.permute.xlu0 %1462
        %v1465 = vadd.f32 %v1460, %v1463
        %1467 = vrot.lane.b32.xlu0 %v1465, 64
        %v1468 = vpop.permute.xlu0 %1467
        %v1470 = vadd.f32 %v1465, %v1468
        %1471 = vst.msk [vmem:[#allocation5] sm:$0xff] %vm1082, %v1470
        %s1472 = scalar_lea.vmem [#allocation2], 8
        %v1473 = vld [vmem:[%s1472] sm:$0xff]
        %v1475 = vsel %vm1082, %v1470, 0
        %1477 = vmatprep.subr.mxu0 0.0
        %1478 = vmatpush1.msra.mxu0 %v607
        %1479 = vmatprep.subr.mxu0 0.0
        %1480 = vmatpush1.msra.mxu0 %v608
        %1481 = vmatprep.subr.mxu0 0.0
        %1482 = vmatpush1.msra.mxu0 %v609
        %1483 = vmatprep.subr.mxu0 0.0
        %1484 = vmatpush1.msra.mxu0 %v610
        %1485 = vmatprep.subr.mxu0 0.0
        %1486 = vmatpush1.msra.mxu0 0.0
        %1487 = vmatprep.subr.mxu0 0.0
        %1488 = vmatpush1.msra.mxu0 0.0
        %1489 = vmatprep.subr.mxu0 0.0
        %1490 = vmatpush1.msra.mxu0 0.0
        %1491 = vmatprep.subr.mxu0 0.0
        %1492 = vmatpush1.msra.mxu0 0.0
        %1493 = vmatprep.subr.mxu0 0.0
        %1494 = vmatpush1.msra.mxu0 0.0
        %1495 = vmatprep.subr.mxu0 0.0
        %1496 = vmatpush1.msra.mxu0 0.0
        %1497 = vmatprep.subr.mxu0 0.0
        %1498 = vmatpush1.msra.mxu0 0.0
        %1499 = vmatprep.subr.mxu0 0.0
        %1500 = vmatpush1.msra.mxu0 0.0
        %1501 = vmatprep.subr.mxu0 0.0
        %1502 = vmatpush1.msra.mxu0 0.0
        %1503 = vmatprep.subr.mxu0 0.0
        %1504 = vmatpush1.msra.mxu0 0.0
        %1505 = vmatprep.subr.mxu0 0.0
        %1506 = vmatpush1.msra.mxu0 0.0
        %1507 = vmatprep.subr.mxu0 0.0
        %1508 = vmatpush1.msra.mxu0 0.0
        %1509 = vmatprep.subr.mxu0 0.0
        %1510 = vmatpush1.msra.mxu0 0.0
        %1511 = vmatprep.subr.mxu0 0.0
        %1512 = vmatpush1.msra.mxu0 0.0
        %1513 = vmatprep.subr.mxu0 0.0
        %1514 = vmatpush1.msra.mxu0 0.0
        %1515 = vmatprep.subr.mxu0 0.0
        %1516 = vmatpush1.msra.mxu0 0.0
        %1517 = vmatprep.subr.mxu0 0.0
        %1518 = vmatpush1.msra.mxu0 0.0
        %1519 = vmatprep.subr.mxu0 0.0
        %1520 = vmatpush1.msra.mxu0 0.0
        %1521 = vmatprep.subr.mxu0 0.0
        %1522 = vmatpush1.msra.mxu0 0.0
        %1523 = vmatprep.subr.mxu0 0.0
        %1524 = vmatpush1.msra.mxu0 0.0
        %1525 = vmatprep.subr.mxu0 0.0
        %1526 = vmatpush1.msra.mxu0 0.0
        %1527 = vmatprep.subr.mxu0 0.0
        %1528 = vmatpush1.msra.mxu0 0.0
        %1529 = vmatprep.subr.mxu0 0.0
        %1530 = vmatpush1.msra.mxu0 0.0
        %1531 = vmatprep.subr.mxu0 0.0
        %1532 = vmatpush1.msra.mxu0 0.0
        %1533 = vmatprep.subr.mxu0 0.0
        %1534 = vmatpush1.msra.mxu0 0.0
        %1535 = vmatprep.subr.mxu0 0.0
        %1536 = vmatpush1.msra.mxu0 0.0
        %1537 = vmatprep.subr.mxu0 0.0
        %1538 = vmatpush1.msra.mxu0 0.0
        %1539 = vmatprep.subr.mxu0 0.0
        %1540 = vmatpush1.msra.mxu0 0.0
        %1541 = vmatprep.mubr.f32.mxu0 0.0
        %1542 = vmatmul.mubr.f32.gmra.mrb[0].mxu0 %v1475
        %v1543 = vpop.f32.mrb[0].mxu0
        %v1544 = vadd.f32 0.0, %v1543
        %v1545 = vpop.f32.mrb[0].mxu0
        %1546 = vdwg.mxu0
        %v1547 = vadd.f32 %v1473, %v1544
        %v1548 = vtanh.pop %v1547
        %s1549 = scalar_lea.vmem [#allocation3], 8
        %v1550 = vld [vmem:[%s1549] sm:$0xff]
        %v1551 = vmul.f32 %v1548, %v1550
        %1553 = vrot.lane.b32.xlu0 %v1551, 96
        %v1554 = vpop.permute.xlu0 %1553
        %v1556 = vadd.f32 %v1551, %v1554
        %1558 = vrot.lane.b32.xlu0 %v1556, 64
        %v1559 = vpop.permute.xlu0 %1558
        %v1561 = vadd.f32 %v1556, %v1559
        %s1562 = scalar_lea.vmem [#allocation5], 8
        %1563 = vst.msk [vmem:[%s1562] sm:$0xff] %vm1082, %v1561
        %s1564 = scalar_lea.vmem [#allocation2], 16
        %v1565 = vld [vmem:[%s1564] sm:$0xff]
        %v1567 = vsel %vm1082, %v1561, 0
        %1569 = vmatprep.subr.mxu0 0.0
        %1570 = vmatpush1.msra.mxu0 %v607
        %1571 = vmatprep.subr.mxu0 0.0
        %1572 = vmatpush1.msra.mxu0 %v608
        %1573 = vmatprep.subr.mxu0 0.0
        %1574 = vmatpush1.msra.mxu0 %v609
        %1575 = vmatprep.subr.mxu0 0.0
        %1576 = vmatpush1.msra.mxu0 %v610
        %1577 = vmatprep.subr.mxu0 0.0
        %1578 = vmatpush1.msra.mxu0 0.0
        %1579 = vmatprep.subr.mxu0 0.0
        %1580 = vmatpush1.msra.mxu0 0.0
        %1581 = vmatprep.subr.mxu0 0.0
        %1582 = vmatpush1.msra.mxu0 0.0
        %1583 = vmatprep.subr.mxu0 0.0
        %1584 = vmatpush1.msra.mxu0 0.0
        %1585 = vmatprep.subr.mxu0 0.0
        %1586 = vmatpush1.msra.mxu0 0.0
        %1587 = vmatprep.subr.mxu0 0.0
        %1588 = vmatpush1.msra.mxu0 0.0
        %1589 = vmatprep.subr.mxu0 0.0
        %1590 = vmatpush1.msra.mxu0 0.0
        %1591 = vmatprep.subr.mxu0 0.0
        %1592 = vmatpush1.msra.mxu0 0.0
        %1593 = vmatprep.subr.mxu0 0.0
        %1594 = vmatpush1.msra.mxu0 0.0
        %1595 = vmatprep.subr.mxu0 0.0
        %1596 = vmatpush1.msra.mxu0 0.0
        %1597 = vmatprep.subr.mxu0 0.0
        %1598 = vmatpush1.msra.mxu0 0.0
        %1599 = vmatprep.subr.mxu0 0.0
        %1600 = vmatpush1.msra.mxu0 0.0
        %1601 = vmatprep.subr.mxu0 0.0
        %1602 = vmatpush1.msra.mxu0 0.0
        %1603 = vmatprep.subr.mxu0 0.0
        %1604 = vmatpush1.msra.mxu0 0.0
        %1605 = vmatprep.subr.mxu0 0.0
        %1606 = vmatpush1.msra.mxu0 0.0
        %1607 = vmatprep.subr.mxu0 0.0
        %1608 = vmatpush1.msra.mxu0 0.0
        %1609 = vmatprep.subr.mxu0 0.0
        %1610 = vmatpush1.msra.mxu0 0.0
        %1611 = vmatprep.subr.mxu0 0.0
        %1612 = vmatpush1.msra.mxu0 0.0
        %1613 = vmatprep.subr.mxu0 0.0
        %1614 = vmatpush1.msra.mxu0 0.0
        %1615 = vmatprep.subr.mxu0 0.0
        %1616 = vmatpush1.msra.mxu0 0.0
        %1617 = vmatprep.subr.mxu0 0.0
        %1618 = vmatpush1.msra.mxu0 0.0
        %1619 = vmatprep.subr.mxu0 0.0
        %1620 = vmatpush1.msra.mxu0 0.0
        %1621 = vmatprep.subr.mxu0 0.0
        %1622 = vmatpush1.msra.mxu0 0.0
        %1623 = vmatprep.subr.mxu0 0.0
        %1624 = vmatpush1.msra.mxu0 0.0
        %1625 = vmatprep.subr.mxu0 0.0
        %1626 = vmatpush1.msra.mxu0 0.0
        %1627 = vmatprep.subr.mxu0 0.0
        %1628 = vmatpush1.msra.mxu0 0.0
        %1629 = vmatprep.subr.mxu0 0.0
        %1630 = vmatpush1.msra.mxu0 0.0
        %1631 = vmatprep.subr.mxu0 0.0
        %1632 = vmatpush1.msra.mxu0 0.0
        %1633 = vmatprep.mubr.f32.mxu0 0.0
        %1634 = vmatmul.mubr.f32.gmra.mrb[0].mxu0 %v1567
        %v1635 = vpop.f32.mrb[0].mxu0
        %v1636 = vadd.f32 0.0, %v1635
        %v1637 = vpop.f32.mrb[0].mxu0
        %1638 = vdwg.mxu0
        %v1639 = vadd.f32 %v1565, %v1636
        %v1640 = vtanh.pop %v1639
        %s1641 = scalar_lea.vmem [#allocation3], 16
        %v1642 = vld [vmem:[%s1641] sm:$0xff]
        %v1643 = vmul.f32 %v1640, %v1642
        %1645 = vrot.lane.b32.xlu0 %v1643, 96
        %v1646 = vpop.permute.xlu0 %1645
        %v1648 = vadd.f32 %v1643, %v1646
        %1650 = vrot.lane.b32.xlu0 %v1648, 64
        %v1651 = vpop.permute.xlu0 %1650
        %v1653 = vadd.f32 %v1648, %v1651
        %s1654 = scalar_lea.vmem [#allocation5], 16
        %1655 = vst.msk [vmem:[%s1654] sm:$0xff] %vm1082, %v1653
        %s1656 = scalar_lea.vmem [#allocation2], 24
        %v1657 = vld [vmem:[%s1656] sm:$0xff]
        %v1659 = vsel %vm1082, %v1653, 0
        %1661 = vmatprep.subr.mxu0 0.0
        %1662 = vmatpush1.msra.mxu0 %v607
        %1663 = vmatprep.subr.mxu0 0.0
        %1664 = vmatpush1.msra.mxu0 %v608
        %1665 = vmatprep.subr.mxu0 0.0
        %1666 = vmatpush1.msra.mxu0 %v609
        %1667 = vmatprep.subr.mxu0 0.0
        %1668 = vmatpush1.msra.mxu0 %v610
        %1669 = vmatprep.subr.mxu0 0.0
        %1670 = vmatpush1.msra.mxu0 0.0
        %1671 = vmatprep.subr.mxu0 0.0
        %1672 = vmatpush1.msra.mxu0 0.0
        %1673 = vmatprep.subr.mxu0 0.0
        %1674 = vmatpush1.msra.mxu0 0.0
        %1675 = vmatprep.subr.mxu0 0.0
        %1676 = vmatpush1.msra.mxu0 0.0
        %1677 = vmatprep.subr.mxu0 0.0
        %1678 = vmatpush1.msra.mxu0 0.0
        %1679 = vmatprep.subr.mxu0 0.0
        %1680 = vmatpush1.msra.mxu0 0.0
        %1681 = vmatprep.subr.mxu0 0.0
        %1682 = vmatpush1.msra.mxu0 0.0
        %1683 = vmatprep.subr.mxu0 0.0
        %1684 = vmatpush1.msra.mxu0 0.0
        %1685 = vmatprep.subr.mxu0 0.0
        %1686 = vmatpush1.msra.mxu0 0.0
        %1687 = vmatprep.subr.mxu0 0.0
        %1688 = vmatpush1.msra.mxu0 0.0
        %1689 = vmatprep.subr.mxu0 0.0
        %1690 = vmatpush1.msra.mxu0 0.0
        %1691 = vmatprep.subr.mxu0 0.0
        %1692 = vmatpush1.msra.mxu0 0.0
        %1693 = vmatprep.subr.mxu0 0.0
        %1694 = vmatpush1.msra.mxu0 0.0
        %1695 = vmatprep.subr.mxu0 0.0
        %1696 = vmatpush1.msra.mxu0 0.0
        %1697 = vmatprep.subr.mxu0 0.0
        %1698 = vmatpush1.msra.mxu0 0.0
        %1699 = vmatprep.subr.mxu0 0.0
        %1700 = vmatpush1.msra.mxu0 0.0
        %1701 = vmatprep.subr.mxu0 0.0
        %1702 = vmatpush1.msra.mxu0 0.0
        %1703 = vmatprep.subr.mxu0 0.0
        %1704 = vmatpush1.msra.mxu0 0.0
        %1705 = vmatprep.subr.mxu0 0.0
        %1706 = vmatpush1.msra.mxu0 0.0
        %1707 = vmatprep.subr.mxu0 0.0
        %1708 = vmatpush1.msra.mxu0 0.0
        %1709 = vmatprep.subr.mxu0 0.0
        %1710 = vmatpush1.msra.mxu0 0.0
        %1711 = vmatprep.subr.mxu0 0.0
        %1712 = vmatpush1.msra.mxu0 0.0
        %1713 = vmatprep.subr.mxu0 0.0
        %1714 = vmatpush1.msra.mxu0 0.0
        %1715 = vmatprep.subr.mxu0 0.0
        %1716 = vmatpush1.msra.mxu0 0.0
        %1717 = vmatprep.subr.mxu0 0.0
        %1718 = vmatpush1.msra.mxu0 0.0
        %1719 = vmatprep.subr.mxu0 0.0
        %1720 = vmatpush1.msra.mxu0 0.0
        %1721 = vmatprep.subr.mxu0 0.0
        %1722 = vmatpush1.msra.mxu0 0.0
        %1723 = vmatprep.subr.mxu0 0.0
        %1724 = vmatpush1.msra.mxu0 0.0
        %1725 = vmatprep.mubr.f32.mxu0 0.0
        %1726 = vmatmul.mubr.f32.gmra.mrb[0].mxu0 %v1659
        %v1727 = vpop.f32.mrb[0].mxu0
        %v1728 = vadd.f32 0.0, %v1727
        %v1729 = vpop.f32.mrb[0].mxu0
        %1730 = vdwg.mxu0
        %v1731 = vadd.f32 %v1657, %v1728
        %v1732 = vtanh.pop %v1731
        %s1733 = scalar_lea.vmem [#allocation3], 24
        %v1734 = vld [vmem:[%s1733] sm:$0xff]
        %v1735 = vmul.f32 %v1732, %v1734
        %1737 = vrot.lane.b32.xlu0 %v1735, 96
        %v1738 = vpop.permute.xlu0 %1737
        %v1740 = vadd.f32 %v1735, %v1738
        %1742 = vrot.lane.b32.xlu0 %v1740, 64
        %v1743 = vpop.permute.xlu0 %1742
        %v1745 = vadd.f32 %v1740, %v1743
        %s1746 = scalar_lea.vmem [#allocation5], 24
        %1747 = vst.msk [vmem:[%s1746] sm:$0xff] %vm1082, %v1745
        %1748 = vst.msk [vmem:[#allocation6] sm:$0xff] %vm1082, %v1745
        %v1749 = vld [vmem:[#allocation5] sm:$0xff]
        %v1750 = vld [vmem:[#allocation5 + $0x8] sm:$0xff]
        %v1751 = vld [vmem:[#allocation5 + $0x10] sm:$0xff]
        %v1752 = vld [vmem:[#allocation5 + $0x18] sm:$0xff]
        %v1754 = vlaneseq
        %v1755 = vshrl.u32 %v1754, 7
        %v1756 = vsub.s32 0, %v1755
        %v1757 = vrot.slane %v622, %v1756
        %v1760 = vsel %vm1082, %v1749, 0
        %v1763 = vsel %vm1082, %v1750, 0
        %v1766 = vsel %vm1082, %v1751, 0
        %v1769 = vsel %vm1082, %v1752, 0
        %1771 = vmatprep.subr.mxu0 0.0
        %1772 = vmatpush1.msra.mxu0 %v618
        %1773 = vmatprep.subr.mxu0 0.0
        %1774 = vmatpush1.msra.mxu0 %v619
        %1775 = vmatprep.subr.mxu0 0.0
        %1776 = vmatpush1.msra.mxu0 %v620
        %1777 = vmatprep.subr.mxu0 0.0
        %1778 = vmatpush1.msra.mxu0 %v621
        %1779 = vmatprep.subr.mxu0 0.0
        %1780 = vmatpush1.msra.mxu0 0.0
        %1781 = vmatprep.subr.mxu0 0.0
        %1782 = vmatpush1.msra.mxu0 0.0
        %1783 = vmatprep.subr.mxu0 0.0
        %1784 = vmatpush1.msra.mxu0 0.0
        %1785 = vmatprep.subr.mxu0 0.0
        %1786 = vmatpush1.msra.mxu0 0.0
        %1787 = vmatprep.subr.mxu0 0.0
        %1788 = vmatpush1.msra.mxu0 0.0
        %1789 = vmatprep.subr.mxu0 0.0
        %1790 = vmatpush1.msra.mxu0 0.0
        %1791 = vmatprep.subr.mxu0 0.0
        %1792 = vmatpush1.msra.mxu0 0.0
        %1793 = vmatprep.subr.mxu0 0.0
        %1794 = vmatpush1.msra.mxu0 0.0
        %1795 = vmatprep.subr.mxu0 0.0
        %1796 = vmatpush1.msra.mxu0 0.0
        %1797 = vmatprep.subr.mxu0 0.0
        %1798 = vmatpush1.msra.mxu0 0.0
        %1799 = vmatprep.subr.mxu0 0.0
        %1800 = vmatpush1.msra.mxu0 0.0
        %1801 = vmatprep.subr.mxu0 0.0
        %1802 = vmatpush1.msra.mxu0 0.0
        %1803 = vmatprep.subr.mxu0 0.0
        %1804 = vmatpush1.msra.mxu0 0.0
        %1805 = vmatprep.subr.mxu0 0.0
        %1806 = vmatpush1.msra.mxu0 0.0
        %1807 = vmatprep.subr.mxu0 0.0
        %1808 = vmatpush1.msra.mxu0 0.0
        %1809 = vmatprep.subr.mxu0 0.0
        %1810 = vmatpush1.msra.mxu0 0.0
        %1811 = vmatprep.subr.mxu0 0.0
        %1812 = vmatpush1.msra.mxu0 0.0
        %1813 = vmatprep.subr.mxu0 0.0
        %1814 = vmatpush1.msra.mxu0 0.0
        %1815 = vmatprep.subr.mxu0 0.0
        %1816 = vmatpush1.msra.mxu0 0.0
        %1817 = vmatprep.subr.mxu0 0.0
        %1818 = vmatpush1.msra.mxu0 0.0
        %1819 = vmatprep.subr.mxu0 0.0
        %1820 = vmatpush1.msra.mxu0 0.0
        %1821 = vmatprep.subr.mxu0 0.0
        %1822 = vmatpush1.msra.mxu0 0.0
        %1823 = vmatprep.subr.mxu0 0.0
        %1824 = vmatpush1.msra.mxu0 0.0
        %1825 = vmatprep.subr.mxu0 0.0
        %1826 = vmatpush1.msra.mxu0 0.0
        %1827 = vmatprep.subr.mxu0 0.0
        %1828 = vmatpush1.msra.mxu0 0.0
        %1829 = vmatprep.subr.mxu0 0.0
        %1830 = vmatpush1.msra.mxu0 0.0
        %1831 = vmatprep.subr.mxu0 0.0
        %1832 = vmatpush1.msra.mxu0 0.0
        %1833 = vmatprep.subr.mxu0 0.0
        %1834 = vmatpush1.msra.mxu0 0.0
        %1835 = vmatprep.mubr.f32.mxu0 0.0
        %1836 = vmatmul.mubr.f32.gmra.mrb[0].mxu0 %v1760
        %v1837 = vpop.f32.mrb[0].mxu0
        %v1838 = vadd.f32 %v1757, %v1837
        %v1839 = vpop.f32.mrb[0].mxu0
        %1840 = vmatprep.mubr.f32.mxu0 0.0
        %1841 = vmatmul.mubr.f32.gmra.mrb[0].mxu0 %v1763
        %v1842 = vpop.f32.mrb[0].mxu0
        %v1843 = vadd.f32 %v1757, %v1842
        %v1844 = vpop.f32.mrb[0].mxu0
        %1845 = vmatprep.mubr.f32.mxu0 0.0
        %1846 = vmatmul.mubr.f32.gmra.mrb[0].mxu0 %v1766
        %v1847 = vpop.f32.mrb[0].mxu0
        %v1848 = vadd.f32 %v1757, %v1847
        %v1849 = vpop.f32.mrb[0].mxu0
        %1850 = vmatprep.mubr.f32.mxu0 0.0
        %1851 = vmatmul.mubr.f32.gmra.mrb[0].mxu0 %v1769
        %v1852 = vpop.f32.mrb[0].mxu0
        %v1853 = vadd.f32 %v1757, %v1852
        %v1854 = vpop.f32.mrb[0].mxu0
        %1855 = vdwg.mxu0
        %v1856 = vmax.f32 %v1838, 0.0
        %v1857 = vmax.f32 %v1843, 0.0
        %v1858 = vmax.f32 %v1848, 0.0
        %v1859 = vmax.f32 %v1853, 0.0
        %v1861 = vlaneseq
        %v1862 = vshrl.u32 %v1861, 7
        %v1863 = vsub.s32 0, %v1862
        %v1864 = vrot.slane %v627, %v1863
        %v1867 = vsel %vm1082, %v1856, 0
        %v1870 = vsel %vm1082, %v1857, 0
        %v1873 = vsel %vm1082, %v1858, 0
        %v1876 = vsel %vm1082, %v1859, 0
        %1878 = vmatprep.subr.mxu0 0.0
        %1879 = vmatpush1.msra.mxu0 %v623
        %1880 = vmatprep.subr.mxu0 0.0
        %1881 = vmatpush1.msra.mxu0 %v624
        %1882 = vmatprep.subr.mxu0 0.0
        %1883 = vmatpush1.msra.mxu0 %v625
        %1884 = vmatprep.subr.mxu0 0.0
        %1885 = vmatpush1.msra.mxu0 %v626
        %1886 = vmatprep.subr.mxu0 0.0
        %1887 = vmatpush1.msra.mxu0 0.0
        %1888 = vmatprep.subr.mxu0 0.0
        %1889 = vmatpush1.msra.mxu0 0.0
        %1890 = vmatprep.subr.mxu0 0.0
        %1891 = vmatpush1.msra.mxu0 0.0
        %1892 = vmatprep.subr.mxu0 0.0
        %1893 = vmatpush1.msra.mxu0 0.0
        %1894 = vmatprep.subr.mxu0 0.0
        %1895 = vmatpush1.msra.mxu0 0.0
        %1896 = vmatprep.subr.mxu0 0.0
        %1897 = vmatpush1.msra.mxu0 0.0
        %1898 = vmatprep.subr.mxu0 0.0
        %1899 = vmatpush1.msra.mxu0 0.0
        %1900 = vmatprep.subr.mxu0 0.0
        %1901 = vmatpush1.msra.mxu0 0.0
        %1902 = vmatprep.subr.mxu0 0.0
        %1903 = vmatpush1.msra.mxu0 0.0
        %1904 = vmatprep.subr.mxu0 0.0
        %1905 = vmatpush1.msra.mxu0 0.0
        %1906 = vmatprep.subr.mxu0 0.0
        %1907 = vmatpush1.msra.mxu0 0.0
        %1908 = vmatprep.subr.mxu0 0.0
        %1909 = vmatpush1.msra.mxu0 0.0
        %1910 = vmatprep.subr.mxu0 0.0
        %1911 = vmatpush1.msra.mxu0 0.0
        %1912 = vmatprep.subr.mxu0 0.0
        %1913 = vmatpush1.msra.mxu0 0.0
        %1914 = vmatprep.subr.mxu0 0.0
        %1915 = vmatpush1.msra.mxu0 0.0
        %1916 = vmatprep.subr.mxu0 0.0
        %1917 = vmatpush1.msra.mxu0 0.0
        %1918 = vmatprep.subr.mxu0 0.0
        %1919 = vmatpush1.msra.mxu0 0.0
        %1920 = vmatprep.subr.mxu0 0.0
        %1921 = vmatpush1.msra.mxu0 0.0
        %1922 = vmatprep.subr.mxu0 0.0
        %1923 = vmatpush1.msra.mxu0 0.0
        %1924 = vmatprep.subr.mxu0 0.0
        %1925 = vmatpush1.msra.mxu0 0.0
        %1926 = vmatprep.subr.mxu0 0.0
        %1927 = vmatpush1.msra.mxu0 0.0
        %1928 = vmatprep.subr.mxu0 0.0
        %1929 = vmatpush1.msra.mxu0 0.0
        %1930 = vmatprep.subr.mxu0 0.0
        %1931 = vmatpush1.msra.mxu0 0.0
        %1932 = vmatprep.subr.mxu0 0.0
        %1933 = vmatpush1.msra.mxu0 0.0
        %1934 = vmatprep.subr.mxu0 0.0
        %1935 = vmatpush1.msra.mxu0 0.0
        %1936 = vmatprep.subr.mxu0 0.0
        %1937 = vmatpush1.msra.mxu0 0.0
        %1938 = vmatprep.subr.mxu0 0.0
        %1939 = vmatpush1.msra.mxu0 0.0
        %1940 = vmatprep.subr.mxu0 0.0
        %1941 = vmatpush1.msra.mxu0 0.0
        %1942 = vmatprep.mubr.f32.mxu0 0.0
        %1943 = vmatmul.mubr.f32.gmra.mrb[0].mxu0 %v1867
        %v1944 = vpop.f32.mrb[0].mxu0
        %v1945 = vadd.f32 %v1864, %v1944
        %v1946 = vpop.f32.mrb[0].mxu0
        %1947 = vmatprep.mubr.f32.mxu0 0.0
        %1948 = vmatmul.mubr.f32.gmra.mrb[0].mxu0 %v1870
        %v1949 = vpop.f32.mrb[0].mxu0
        %v1950 = vadd.f32 %v1864, %v1949
        %v1951 = vpop.f32.mrb[0].mxu0
        %1952 = vmatprep.mubr.f32.mxu0 0.0
        %1953 = vmatmul.mubr.f32.gmra.mrb[0].mxu0 %v1873
        %v1954 = vpop.f32.mrb[0].mxu0
        %v1955 = vadd.f32 %v1864, %v1954
        %v1956 = vpop.f32.mrb[0].mxu0
        %1957 = vmatprep.mubr.f32.mxu0 0.0
        %1958 = vmatmul.mubr.f32.gmra.mrb[0].mxu0 %v1876
        %v1959 = vpop.f32.mrb[0].mxu0
        %v1960 = vadd.f32 %v1864, %v1959
        %v1961 = vpop.f32.mrb[0].mxu0
        %1962 = vdwg.mxu0
        %1963 = vst [vmem:[%s585] sm:$0xff] %v1945
        %1964 = vst [vmem:[%s585 + $0x8] sm:$0xff] %v1950
        %1965 = vst [vmem:[%s585 + $0x10] sm:$0xff] %v1955
        %1966 = vst [vmem:[%s585 + $0x18] sm:$0xff] %v1960
        %s1967 = sand.u32 %s428, 1
        %s1968 = scalar_lea.sflag [#allocation8], %s1967
        %s1969 = sand.u32 %s428, 1
        %s1970 = smul.addr %s1969, 32
        %s1971 = scalar_lea.vmem [#allocation7], %s1970
        // Predicated region
        $region104: #{tpu_custom_call.1} parent=91 // pred_check
          %p1972 = pneg %p438
        $region105: #{tpu_custom_call.1} parent=91 // pred_check_branch
          %1974 = sbr.rel (%p1972) target = $region107
        $region106: #{tpu_custom_call.1} parent=91 // pred_region
          %s1975 = smul.u32 4, %s32
          %s1977 = ssub.s32 512, 512
          %1978 = vsyncadd %s1968, %s1977
          %s1979 = smul.addr %s1975, 128
          %s1980 = scalar_lea.hbm %s18, %s1979
          %s1981 = sshll.u32 %s1971, 4
          %s1982 = int_to_ptr.vmem [resolvable:$true] %s1981
          %1987 = dma.vmem_to_hbm [thread:$0]  %s1982, 512, %s1980, %s1968, 128, 128, 8
        $region107: #{tpu_custom_call.1} parent=91 // pred_fallthru
          _
      $region92: #{tpu_custom_call.1} parent=5 // pred_fallthru
        _
      %p1988 = scmp.le.s32.totalorder 2, %s27
      // Predicated region
      $region108: #{tpu_custom_call.1} parent=5 // pred_check
        %p1989 = pneg %p1988
      $region109: #{tpu_custom_call.1} parent=5 // pred_check_branch
        %1991 = sbr.rel (%p1989) target = $region111
      $region110: #{tpu_custom_call.1} parent=5 // pred_region
        %s1992 = ssub.s32 %s27, 2
        // Predicated region
        $region112: #{tpu_custom_call.1} parent=110 // pred_check
          %p1993 = pneg %p444
        $region113: #{tpu_custom_call.1} parent=110 // pred_check_branch
          %1995 = sbr.rel (%p1993) target = $region115
        $region114: #{tpu_custom_call.1} parent=110 // pred_region
          %s1996 = sand.u32 %s429, 1
          %s1997 = scalar_lea.sflag [#allocation8], %s1996
          %s1998 = sand.u32 %s429, 1
          %s1999 = smul.addr %s1998, 32
          %s2000 = scalar_lea.vmem [#allocation7], %s1999
          %2001 = dma.done %s1997, 512
        $region115: #{tpu_custom_call.1} parent=110 // pred_fallthru
          _
      $region111: #{tpu_custom_call.1} parent=5 // pred_fallthru
        _
    $region6: #{tpu_custom_call.1} parent=1 // loop_footer
      %s31 = sadd.s32 1, %s27
    $region7: #{tpu_custom_call.1} parent=1 // loop_footer_branch
      %26 = sbr.rel target = $region3
    $region8: #{tpu_custom_call.1} parent=1 // loop_exit
      _
    %2002 = vsyncpa [#allocation8], 1
    %s2003 = scalar_lea.sflag [#allocation8], 1
    %2004 = vsyncpa %s2003, 1

</llo_original>
